<compile_context>
chip_gen: v5e
topology: v5e:2x2
jax: 0.10.0
libtpu: 0.0.40
codegen_flags: <defaults>
</compile_context>

<pallas_src>
import jax
import jax.numpy as jnp
from jax import lax
from jax.experimental import pallas as pl
from jax.experimental.pallas import tpu as pltpu


_LANE = 128
_SUB = 8                     # sublanes per f32 vreg tile
_NEG_LOGIT_PAD = -1e9        # sigmoid(pad)==0 and BCEWithLogits(pad, 0)==0 exactly
_SMOOTH = 1.0
_N_CORE_SPLITS = 2           # leading "parallel" grid axis: 2 TensorCores on v7x;
                             # runs sequentially (no harm) on single-TC v5e/v6e


def _cdiv(a, b):
    return -(-a // b)


def _round_up(a, b):
    return _cdiv(a, b) * b


def _tpu_budget():
    """(target block rows, vmem_limit_bytes), picked per TPU generation."""
    try:
        cap = pltpu.get_tpu_info().vmem_capacity_bytes
    except Exception:
        cap = 64 * 1024 * 1024
    if cap >= 100 * 1024 * 1024:           # v5e / v6e: 128 MiB VMEM
        return 4096, 80 * 1024 * 1024
    return 2048, 40 * 1024 * 1024          # v7x: 64 MiB VMEM per core


def _to_slab(x, pad_value):
    """Lane-dense (rows, 128) view of x.  Zero-copy when x.size % 128 == 0."""
    flat = x.reshape(-1)
    n = flat.size
    if n % _LANE:
        # TODO(synk): unaligned tail forces one extra HBM copy of this operand;
        # align sizes upstream to avoid it.  Pad value is exact-neutral.
        flat = jnp.pad(flat, (0, _LANE - n % _LANE), constant_values=pad_value)
    return flat.reshape(-1, _LANE)


def _fused_sums(seg_logits, mask, bce_pairs, mse_pair):
    """One pallas_call computing every reduction TopoLoss needs.

    Returns a float32 vector laid out as
      [dice_inter, dice_pred_sum, dice_tgt_sum, bce_sum_0.., (mse_sum)].
    """
    n_bce = len(bce_pairs)
    has_mse = mse_pair is not None
    n_out = 3 + n_bce + (1 if has_mse else 0)
    out_rows = n_out * _SUB

    target_rows, vmem_limit = _tpu_budget()

    # Operand order: (seg, mask), (bce logits, bce target)*, (mse a, mse b).
    assert seg_logits.size == mask.size
    operands = [(seg_logits, _NEG_LOGIT_PAD), (mask, 0.0)]
    for lg, tg in bce_pairs:
        assert lg.size == tg.size
        operands += [(lg, _NEG_LOGIT_PAD), (tg, 0.0)]
    if has_mse:
        a, b = mse_pair
        assert a.size == b.size
        operands += [(a, 0.0), (b, 0.0)]

    slabs = [_to_slab(x, pv) for x, pv in operands]
    rows = [s.shape[0] for s in slabs]
    max_rows = max(rows)

    tiles_per_core = max(1, _cdiv(_cdiv(max_rows, target_rows), _N_CORE_SPLITS))
    total_tiles = _N_CORE_SPLITS * tiles_per_core

    block_rows, n_blocks, need_mask = [], [], []
    for r in rows:
        br = _round_up(_cdiv(r, total_tiles), _SUB)
        if br > r:
            br = r                      # full-extent block (legal for any r)
        block_rows.append(br)
        n_blocks.append(_cdiv(r, br))
        need_mask.append(total_tiles * br > r)

    def kernel(*refs):
        out_ref = refs[-1]
        in_refs = refs[:-1]
        t = pl.program_id(1)
        gt = pl.program_id(0) * tiles_per_core + t   # logical (unclamped) tile id

        @pl.when(t == 0)
        def _init():
            out_ref[...] = jnp.zeros_like(out_ref)

        def row_mask(idx):
            if not need_mask[idx]:
                return None
            remaining = rows[idx] - gt * block_rows[idx]       # may be <= 0
            rid = lax.broadcasted_iota(jnp.int32, (block_rows[idx], _LANE), 0)
            return rid < remaining

        def mask0(v, m):
            return v if m is None else jnp.where(m, v, 0.0)

        def accumulate(q, v, br):
            # Per-quantity (8,128) accumulator slot -> full-vreg adds/stores.
            if br % _SUB == 0:
                part = v.reshape(br // _SUB, _SUB, _LANE).sum(axis=0)
                out_ref[0, _SUB * q:_SUB * (q + 1), :] += part
            else:
                # Rare tiny/unaligned-block path (e.g. operand rows < 8).
                out_ref[0, _SUB * q:_SUB * q + 1, :] += jnp.sum(
                    v, axis=0, keepdims=True)

        # ---- Dice sums -----------------------------------------------------
        m = row_mask(0)
        p = mask0(jax.nn.sigmoid(in_refs[0][...].astype(jnp.float32)), m)
        tg = mask0(in_refs[1][...].astype(jnp.float32), m)
        accumulate(0, p * tg, block_rows[0])
        accumulate(1, p, block_rows[0])
        accumulate(2, tg, block_rows[1])

        # ---- BCE-with-logits sums -------------------------------------------
        for b in range(n_bce):
            i = 2 + 2 * b
            m = row_mask(i)
            x = in_refs[i][...].astype(jnp.float32)
            z = in_refs[i + 1][...].astype(jnp.float32)
            loss = jnp.maximum(x, 0.0) - x * z + jnp.log1p(jnp.exp(-jnp.abs(x)))
            accumulate(3 + b, mask0(loss, m), block_rows[i])

        # ---- MSE sum --------------------------------------------------------
        if has_mse:
            i = 2 + 2 * n_bce
            m = row_mask(i)
            d = (in_refs[i][...].astype(jnp.float32)
                 - in_refs[i + 1][...].astype(jnp.float32))
            accumulate(3 + n_bce, mask0(d * d, m), block_rows[i])

    # Clamp block indices to the last valid block; tiles past the end re-read
    # a valid block but contribute nothing (row mask is all-false there).
    in_specs = [
        pl.BlockSpec(
            (br, _LANE),
            lambda c, t, _nb=nb: (jnp.minimum(c * tiles_per_core + t, _nb - 1), 0))
        for br, nb in zip(block_rows, n_blocks)
    ]

    out3 = pl.pallas_call(
        kernel,
        out_shape=jax.ShapeDtypeStruct((_N_CORE_SPLITS, out_rows, _LANE),
                                       jnp.float32),
        grid=(_N_CORE_SPLITS, tiles_per_core),
        in_specs=in_specs,
        out_specs=pl.BlockSpec((1, out_rows, _LANE), lambda c, t: (c, 0, 0)),
        compiler_params=pltpu.CompilerParams(
            dimension_semantics=("parallel", "arbitrary"),
            vmem_limit_bytes=vmem_limit,
        ),
    )(*slabs)

    # Cross-core + sublane + lane finish in glue -> (n_out,) f32.
    return out3.reshape(_N_CORE_SPLITS, n_out, _SUB, _LANE).sum(axis=(0, 2, 3))


@jax.jit
def _topo_loss_full(seg, mask, e_log, e_tgt, s_log, s_tgt,
                    g_log, g_tgt, vel, disp, tp_log, tp_tgt,
                    alpha, beta, gamma, delta):
    s = _fused_sums(seg, mask,
                    [(e_log, e_tgt), (s_log, s_tgt),
                     (g_log, g_tgt), (tp_log, tp_tgt)],
                    (vel, disp))
    seg_loss = 1.0 - (2.0 * s[0] + _SMOOTH) / (s[1] + s[2] + _SMOOTH)
    edge_loss = s[3] / e_log.size
    skeleton_loss = s[4] / s_log.size
    growth_loss = s[5] / g_log.size
    topo_point_loss = s[6] / tp_log.size
    velocity_loss = s[7] / vel.size
    return (alpha * seg_loss + beta * edge_loss + gamma * skeleton_loss
            + delta * (growth_loss + velocity_loss + topo_point_loss))


@jax.jit
def _topo_loss_basic(seg, mask, e_log, e_tgt, s_log, s_tgt,
                     alpha, beta, gamma):
    s = _fused_sums(seg, mask, [(e_log, e_tgt), (s_log, s_tgt)], None)
    seg_loss = 1.0 - (2.0 * s[0] + _SMOOTH) / (s[1] + s[2] + _SMOOTH)
    edge_loss = s[3] / e_log.size
    skeleton_loss = s[4] / s_log.size
    return alpha * seg_loss + beta * edge_loss + gamma * skeleton_loss


def topo_loss(predictions, targets, alpha=0.4, beta=0.2, gamma=0.2, delta=0.2):
    """TopoLoss.forward: one fused Pallas reduction + scalar combine, jitted."""
    # TODO(synk): the PyTorch module constructs DifferentiableTopology() in
    # __init__ but never uses it in forward(); its definition is not provided.
    # TODO(synk): forward-only; no custom_vjp is defined for the pallas_call,
    # so differentiate a pure-JAX formulation if gradients are needed.
    if predictions.get('evolution') is None:
        return _topo_loss_basic(
            predictions['segmentation'], targets['current_mask'],
            predictions['edges'], targets['current_edge'],
            predictions['skeleton'], targets['current_skeleton'],
            alpha, beta, gamma)
    return _topo_loss_full(
        predictions['segmentation'], targets['current_mask'],
        predictions['edges'], targets['current_edge'],
        predictions['skeleton'], targets['current_skeleton'],
        predictions['growth_probability'], targets['growth_region'],
        predictions['velocity_field'], targets['displacement'],
        predictions['topology_points'], targets['topology_changes'],
        alpha, beta, gamma, delta)


# ---------------------------------------------------------------------------
# Pure-JAX reference for sanity check
# ---------------------------------------------------------------------------

def _ref_topo_loss(p, t, alpha=0.4, beta=0.2, gamma=0.2, delta=0.2, smooth=1.0):
    def bce(x, z):
        return jnp.mean(jnp.maximum(x, 0) - x * z + jnp.log1p(jnp.exp(-jnp.abs(x))))
    sig = jax.nn.sigmoid(p['segmentation'])
    inter = jnp.sum(sig * t['current_mask'])
    union = jnp.sum(sig) + jnp.sum(t['current_mask'])
    seg = 1.0 - (2.0 * inter + smooth) / (union + smooth)
    edge = bce(p['edges'], t['current_edge'])
    skel = bce(p['skeleton'], t['current_skeleton'])
    base = alpha * seg + beta * edge + gamma * skel
    if p.get('evolution') is None:
        return base
    growth = bce(p['growth_probability'], t['growth_region'])
    vel = jnp.mean((p['velocity_field'] - t['displacement']) ** 2)
    topo = bce(p['topology_points'], t['topology_changes'])
    return base + delta * (growth + vel + topo)


# ---------------------------------------------------------------------------
# Main
# ---------------------------------------------------------------------------

if __name__ == "__main__":
    B, H, W = 2, 16, 16
    key = jax.random.PRNGKey(0)
    ks = jax.random.split(key, 12)

    predictions = {
        'segmentation':       jax.random.normal(ks[0], (B, 1, H, W), jnp.float32),
        'edges':              jax.random.normal(ks[1], (B, 1, H, W), jnp.float32),
        'skeleton':           jax.random.normal(ks[2], (B, 1, H, W), jnp.float32),
        'evolution':          True,  # enables the evolution branch
        'growth_probability': jax.random.normal(ks[3], (B, 1, H, W), jnp.float32),
        'velocity_field':     jax.random.normal(ks[4], (B, 2, H, W), jnp.float32),
        'topology_points':    jax.random.normal(ks[5], (B, 1, H, W), jnp.float32),
    }
    targets = {
        'current_mask':     jax.random.bernoulli(ks[6],  0.5, (B, 1, H, W)).astype(jnp.float32),
        'current_edge':     jax.random.bernoulli(ks[7],  0.3, (B, 1, H, W)).astype(jnp.float32),
        'current_skeleton': jax.random.bernoulli(ks[8],  0.2, (B, 1, H, W)).astype(jnp.float32),
        'growth_region':    jax.random.bernoulli(ks[9],  0.4, (B, 1, H, W)).astype(jnp.float32),
        'displacement':     jax.random.normal(ks[10], (B, 2, H, W), jnp.float32),
        'topology_changes': jax.random.bernoulli(ks[11], 0.1, (B, 1, H, W)).astype(jnp.float32),
    }

    # Full (evolution) branch.
    out_full = jax.block_until_ready(topo_loss(predictions, targets))
    ref_full = _ref_topo_loss(predictions, targets)
    assert jnp.allclose(out_full, ref_full, rtol=1e-5, atol=1e-5), (out_full, ref_full)

    # Basic branch (no 'evolution' key).
    predictions_basic = {k: v for k, v in predictions.items() if k != 'evolution'}
    out_basic = jax.block_until_ready(topo_loss(predictions_basic, targets))
    ref_basic = _ref_topo_loss(predictions_basic, targets)
    assert jnp.allclose(out_basic, ref_basic, rtol=1e-5, atol=1e-5), (out_basic, ref_basic)

    print("KERNEL_OK")
</pallas_src>

<mosaic_0001>
module attributes {stable_mosaic.version = 11 : i64} {
  func.func @kernel(%arg0: i32, %arg1: i32, %arg2: memref<4x128xf32, #tpu.memory_space<vmem>>, %arg3: memref<4x128xf32, #tpu.memory_space<vmem>>, %arg4: memref<4x128xf32, #tpu.memory_space<vmem>>, %arg5: memref<4x128xf32, #tpu.memory_space<vmem>>, %arg6: memref<4x128xf32, #tpu.memory_space<vmem>>, %arg7: memref<4x128xf32, #tpu.memory_space<vmem>>, %arg8: memref<4x128xf32, #tpu.memory_space<vmem>>, %arg9: memref<4x128xf32, #tpu.memory_space<vmem>>, %arg10: memref<4x128xf32, #tpu.memory_space<vmem>>, %arg11: memref<4x128xf32, #tpu.memory_space<vmem>>, %arg12: memref<8x128xf32, #tpu.memory_space<vmem>>, %arg13: memref<8x128xf32, #tpu.memory_space<vmem>>, %arg14: memref<1x64x128xf32, #tpu.memory_space<vmem>>) attributes {dimension_semantics = [#tpu.dimension_semantics<parallel>, #tpu.dimension_semantics<arbitrary>], iteration_bounds = array<i64: 2, 1>, scalar_prefetch = 0 : i64, scratch_operands = 0 : i64, tpu.core_type = #tpu.core_type<tc>, window_params = [{transform_indices = @transform_0, window_bounds = array<i64: 4, 128>}, {transform_indices = @transform_1, window_bounds = array<i64: 4, 128>}, {transform_indices = @transform_2, window_bounds = array<i64: 4, 128>}, {transform_indices = @transform_3, window_bounds = array<i64: 4, 128>}, {transform_indices = @transform_4, window_bounds = array<i64: 4, 128>}, {transform_indices = @transform_5, window_bounds = array<i64: 4, 128>}, {transform_indices = @transform_6, window_bounds = array<i64: 4, 128>}, {transform_indices = @transform_7, window_bounds = array<i64: 4, 128>}, {transform_indices = @transform_8, window_bounds = array<i64: 4, 128>}, {transform_indices = @transform_9, window_bounds = array<i64: 4, 128>}, {transform_indices = @transform_10, window_bounds = array<i64: 8, 128>}, {transform_indices = @transform_11, window_bounds = array<i64: 8, 128>}, {transform_indices = @transform_12, window_bounds = array<i64: 1, 64, 128>}]} {
    %c1_i32 = arith.constant 1 : i32
    %0 = arith.muli %arg0, %c1_i32 : i32
    %1 = arith.addi %0, %arg1 : i32
    %c0_i32 = arith.constant 0 : i32
    %2 = arith.cmpi eq, %arg1, %c0_i32 : i32
    %3 = arith.extui %2 : i1 to i32
    %c0_i32_0 = arith.constant 0 : i32
    %4 = arith.cmpi ne, %3, %c0_i32_0 : i32
    scf.if %4 {
      %cst_98 = arith.constant 0.000000e+00 : f32
      %173 = vector.broadcast %cst_98 : f32 to vector<1x64x128xf32>
      %c0_99 = arith.constant 0 : index
      %c0_100 = arith.constant 0 : index
      %c0_101 = arith.constant 0 : index
      %174 = vector.load %arg14[%c0_99, %c0_100, %c0_101] : memref<1x64x128xf32, #tpu.memory_space<vmem>>, vector<1x64x128xf32>
      tpu.vector_store %arg14[%c0_99, %c0_100, %c0_101], %173 {strides = array<i32>} : memref<1x64x128xf32, #tpu.memory_space<vmem>>, vector<1x64x128xf32>,
    } else {
    }
    %c4_i32 = arith.constant 4 : i32
    %5 = arith.muli %1, %c4_i32 : i32
    %c4_i32_1 = arith.constant 4 : i32
    %6 = arith.subi %c4_i32_1, %5 : i32
    %7 = tpu.iota {dimensions = array<i32: 0>} : vector<4x128xi32>
    %8 = vector.broadcast %6 : i32 to vector<4x128xi32>
    %9 = arith.cmpi slt, %7, %8 : vector<4x128xi32>
    %c0 = arith.constant 0 : index
    %c0_2 = arith.constant 0 : index
    %10 = vector.load %arg2[%c0, %c0_2] : memref<4x128xf32, #tpu.memory_space<vmem>>, vector<4x128xf32>
    %11 = arith.negf %10 : vector<4x128xf32>
    %12 = math.exp %11 : vector<4x128xf32>
    %cst = arith.constant 1.000000e+00 : f32
    %13 = vector.broadcast %cst : f32 to vector<4x128xf32>
    %14 = arith.addf %13, %12 : vector<4x128xf32>
    %15 = arith.divf %13, %14 : vector<4x128xf32>
    %cst_3 = arith.constant 0.000000e+00 : f32
    %16 = vector.broadcast %cst_3 : f32 to vector<4x128xf32>
    %17 = arith.select %9, %15, %16 : vector<4x128xi1>, vector<4x128xf32>
    %c0_4 = arith.constant 0 : index
    %c0_5 = arith.constant 0 : index
    %18 = vector.load %arg3[%c0_4, %c0_5] : memref<4x128xf32, #tpu.memory_space<vmem>>, vector<4x128xf32>
    %cst_6 = arith.constant 0.000000e+00 : f32
    %19 = vector.broadcast %cst_6 : f32 to vector<4x128xf32>
    %20 = arith.select %9, %18, %19 : vector<4x128xi1>, vector<4x128xf32>
    %21 = arith.mulf %17, %20 : vector<4x128xf32>
    %c0_7 = arith.constant 0 : index
    %c0_8 = arith.constant 0 : index
    %c0_9 = arith.constant 0 : index
    %22 = vector.load %arg14[%c0_7, %c0_8, %c0_9] : memref<1x64x128xf32, #tpu.memory_space<vmem>>, vector<1x1x128xf32>
    %23 = vector.shape_cast %22 : vector<1x1x128xf32> to vector<1x128xf32>
    %cst_10 = arith.constant dense<0.000000e+00> : vector<128xf32>
    %24 = vector.multi_reduction <add>, %21, %cst_10 [0] : vector<4x128xf32> to vector<128xf32>
    %25 = vector.shape_cast %24 : vector<128xf32> to vector<1x128xf32>
    %26 = arith.addf %23, %25 : vector<1x128xf32>
    %c0_11 = arith.constant 0 : index
    %c0_12 = arith.constant 0 : index
    %c0_13 = arith.constant 0 : index
    %27 = vector.load %arg14[%c0_11, %c0_12, %c0_13] : memref<1x64x128xf32, #tpu.memory_space<vmem>>, vector<1x1x128xf32>
    %28 = vector.shape_cast %27 : vector<1x1x128xf32> to vector<1x128xf32>
    %29 = vector.shape_cast %26 : vector<1x128xf32> to vector<1x1x128xf32>
    tpu.vector_store %arg14[%c0_11, %c0_12, %c0_13], %29 {strides = array<i32>} : memref<1x64x128xf32, #tpu.memory_space<vmem>>, vector<1x1x128xf32>,
    %c0_14 = arith.constant 0 : index
    %c8 = arith.constant 8 : index
    %c0_15 = arith.constant 0 : index
    %30 = vector.load %arg14[%c0_14, %c8, %c0_15] : memref<1x64x128xf32, #tpu.memory_space<vmem>>, vector<1x1x128xf32>
    %31 = vector.shape_cast %30 : vector<1x1x128xf32> to vector<1x128xf32>
    %cst_16 = arith.constant dense<0.000000e+00> : vector<128xf32>
    %32 = vector.multi_reduction <add>, %17, %cst_16 [0] : vector<4x128xf32> to vector<128xf32>
    %33 = vector.shape_cast %32 : vector<128xf32> to vector<1x128xf32>
    %34 = arith.addf %31, %33 : vector<1x128xf32>
    %c0_17 = arith.constant 0 : index
    %c8_18 = arith.constant 8 : index
    %c0_19 = arith.constant 0 : index
    %35 = vector.load %arg14[%c0_17, %c8_18, %c0_19] : memref<1x64x128xf32, #tpu.memory_space<vmem>>, vector<1x1x128xf32>
    %36 = vector.shape_cast %35 : vector<1x1x128xf32> to vector<1x128xf32>
    %37 = vector.shape_cast %34 : vector<1x128xf32> to vector<1x1x128xf32>
    tpu.vector_store %arg14[%c0_17, %c8_18, %c0_19], %37 {strides = array<i32>} : memref<1x64x128xf32, #tpu.memory_space<vmem>>, vector<1x1x128xf32>,
    %c0_20 = arith.constant 0 : index
    %c16 = arith.constant 16 : index
    %c0_21 = arith.constant 0 : index
    %38 = vector.load %arg14[%c0_20, %c16, %c0_21] : memref<1x64x128xf32, #tpu.memory_space<vmem>>, vector<1x1x128xf32>
    %39 = vector.shape_cast %38 : vector<1x1x128xf32> to vector<1x128xf32>
    %cst_22 = arith.constant dense<0.000000e+00> : vector<128xf32>
    %40 = vector.multi_reduction <add>, %20, %cst_22 [0] : vector<4x128xf32> to vector<128xf32>
    %41 = vector.shape_cast %40 : vector<128xf32> to vector<1x128xf32>
    %42 = arith.addf %39, %41 : vector<1x128xf32>
    %c0_23 = arith.constant 0 : index
    %c16_24 = arith.constant 16 : index
    %c0_25 = arith.constant 0 : index
    %43 = vector.load %arg14[%c0_23, %c16_24, %c0_25] : memref<1x64x128xf32, #tpu.memory_space<vmem>>, vector<1x1x128xf32>
    %44 = vector.shape_cast %43 : vector<1x1x128xf32> to vector<1x128xf32>
    %45 = vector.shape_cast %42 : vector<1x128xf32> to vector<1x1x128xf32>
    tpu.vector_store %arg14[%c0_23, %c16_24, %c0_25], %45 {strides = array<i32>} : memref<1x64x128xf32, #tpu.memory_space<vmem>>, vector<1x1x128xf32>,
    %c4_i32_26 = arith.constant 4 : i32
    %46 = arith.muli %1, %c4_i32_26 : i32
    %c4_i32_27 = arith.constant 4 : i32
    %47 = arith.subi %c4_i32_27, %46 : i32
    %48 = tpu.iota {dimensions = array<i32: 0>} : vector<4x128xi32>
    %49 = vector.broadcast %47 : i32 to vector<4x128xi32>
    %50 = arith.cmpi slt, %48, %49 : vector<4x128xi32>
    %c0_28 = arith.constant 0 : index
    %c0_29 = arith.constant 0 : index
    %51 = vector.load %arg4[%c0_28, %c0_29] : memref<4x128xf32, #tpu.memory_space<vmem>>, vector<4x128xf32>
    %c0_30 = arith.constant 0 : index
    %c0_31 = arith.constant 0 : index
    %52 = vector.load %arg5[%c0_30, %c0_31] : memref<4x128xf32, #tpu.memory_space<vmem>>, vector<4x128xf32>
    %cst_32 = arith.constant 0.000000e+00 : f32
    %53 = vector.broadcast %cst_32 : f32 to vector<4x128xf32>
    %54 = arith.maximumf %51, %53 : vector<4x128xf32>
    %55 = arith.mulf %51, %52 : vector<4x128xf32>
    %56 = arith.subf %54, %55 : vector<4x128xf32>
    %57 = math.absf %51 : vector<4x128xf32>
    %cst_33 = arith.constant 0.000000e+00 : f32
    %58 = vector.broadcast %cst_33 : f32 to vector<4x128xf32>
    %59 = arith.subf %58, %57 : vector<4x128xf32>
    %60 = math.exp %59 : vector<4x128xf32>
    %61 = math.log1p %60 : vector<4x128xf32>
    %62 = arith.addf %56, %61 : vector<4x128xf32>
    %cst_34 = arith.constant 0.000000e+00 : f32
    %63 = vector.broadcast %cst_34 : f32 to vector<4x128xf32>
    %64 = arith.select %50, %62, %63 : vector<4x128xi1>, vector<4x128xf32>
    %c0_35 = arith.constant 0 : index
    %c24 = arith.constant 24 : index
    %c0_36 = arith.constant 0 : index
    %65 = vector.load %arg14[%c0_35, %c24, %c0_36] : memref<1x64x128xf32, #tpu.memory_space<vmem>>, vector<1x1x128xf32>
    %66 = vector.shape_cast %65 : vector<1x1x128xf32> to vector<1x128xf32>
    %cst_37 = arith.constant dense<0.000000e+00> : vector<128xf32>
    %67 = vector.multi_reduction <add>, %64, %cst_37 [0] : vector<4x128xf32> to vector<128xf32>
    %68 = vector.shape_cast %67 : vector<128xf32> to vector<1x128xf32>
    %69 = arith.addf %66, %68 : vector<1x128xf32>
    %c0_38 = arith.constant 0 : index
    %c24_39 = arith.constant 24 : index
    %c0_40 = arith.constant 0 : index
    %70 = vector.load %arg14[%c0_38, %c24_39, %c0_40] : memref<1x64x128xf32, #tpu.memory_space<vmem>>, vector<1x1x128xf32>
    %71 = vector.shape_cast %70 : vector<1x1x128xf32> to vector<1x128xf32>
    %72 = vector.shape_cast %69 : vector<1x128xf32> to vector<1x1x128xf32>
    tpu.vector_store %arg14[%c0_38, %c24_39, %c0_40], %72 {strides = array<i32>} : memref<1x64x128xf32, #tpu.memory_space<vmem>>, vector<1x1x128xf32>,
    %c4_i32_41 = arith.constant 4 : i32
    %73 = arith.muli %1, %c4_i32_41 : i32
    %c4_i32_42 = arith.constant 4 : i32
    %74 = arith.subi %c4_i32_42, %73 : i32
    %75 = tpu.iota {dimensions = array<i32: 0>} : vector<4x128xi32>
    %76 = vector.broadcast %74 : i32 to vector<4x128xi32>
    %77 = arith.cmpi slt, %75, %76 : vector<4x128xi32>
    %c0_43 = arith.constant 0 : index
    %c0_44 = arith.constant 0 : index
    %78 = vector.load %arg6[%c0_43, %c0_44] : memref<4x128xf32, #tpu.memory_space<vmem>>, vector<4x128xf32>
    %c0_45 = arith.constant 0 : index
    %c0_46 = arith.constant 0 : index
    %79 = vector.load %arg7[%c0_45, %c0_46] : memref<4x128xf32, #tpu.memory_space<vmem>>, vector<4x128xf32>
    %cst_47 = arith.constant 0.000000e+00 : f32
    %80 = vector.broadcast %cst_47 : f32 to vector<4x128xf32>
    %81 = arith.maximumf %78, %80 : vector<4x128xf32>
    %82 = arith.mulf %78, %79 : vector<4x128xf32>
    %83 = arith.subf %81, %82 : vector<4x128xf32>
    %84 = math.absf %78 : vector<4x128xf32>
    %cst_48 = arith.constant 0.000000e+00 : f32
    %85 = vector.broadcast %cst_48 : f32 to vector<4x128xf32>
    %86 = arith.subf %85, %84 : vector<4x128xf32>
    %87 = math.exp %86 : vector<4x128xf32>
    %88 = math.log1p %87 : vector<4x128xf32>
    %89 = arith.addf %83, %88 : vector<4x128xf32>
    %cst_49 = arith.constant 0.000000e+00 : f32
    %90 = vector.broadcast %cst_49 : f32 to vector<4x128xf32>
    %91 = arith.select %77, %89, %90 : vector<4x128xi1>, vector<4x128xf32>
    %c0_50 = arith.constant 0 : index
    %c32 = arith.constant 32 : index
    %c0_51 = arith.constant 0 : index
    %92 = vector.load %arg14[%c0_50, %c32, %c0_51] : memref<1x64x128xf32, #tpu.memory_space<vmem>>, vector<1x1x128xf32>
    %93 = vector.shape_cast %92 : vector<1x1x128xf32> to vector<1x128xf32>
    %cst_52 = arith.constant dense<0.000000e+00> : vector<128xf32>
    %94 = vector.multi_reduction <add>, %91, %cst_52 [0] : vector<4x128xf32> to vector<128xf32>
    %95 = vector.shape_cast %94 : vector<128xf32> to vector<1x128xf32>
    %96 = arith.addf %93, %95 : vector<1x128xf32>
    %c0_53 = arith.constant 0 : index
    %c32_54 = arith.constant 32 : index
    %c0_55 = arith.constant 0 : index
    %97 = vector.load %arg14[%c0_53, %c32_54, %c0_55] : memref<1x64x128xf32, #tpu.memory_space<vmem>>, vector<1x1x128xf32>
    %98 = vector.shape_cast %97 : vector<1x1x128xf32> to vector<1x128xf32>
    %99 = vector.shape_cast %96 : vector<1x128xf32> to vector<1x1x128xf32>
    tpu.vector_store %arg14[%c0_53, %c32_54, %c0_55], %99 {strides = array<i32>} : memref<1x64x128xf32, #tpu.memory_space<vmem>>, vector<1x1x128xf32>,
    %c4_i32_56 = arith.constant 4 : i32
    %100 = arith.muli %1, %c4_i32_56 : i32
    %c4_i32_57 = arith.constant 4 : i32
    %101 = arith.subi %c4_i32_57, %100 : i32
    %102 = tpu.iota {dimensions = array<i32: 0>} : vector<4x128xi32>
    %103 = vector.broadcast %101 : i32 to vector<4x128xi32>
    %104 = arith.cmpi slt, %102, %103 : vector<4x128xi32>
    %c0_58 = arith.constant 0 : index
    %c0_59 = arith.constant 0 : index
    %105 = vector.load %arg8[%c0_58, %c0_59] : memref<4x128xf32, #tpu.memory_space<vmem>>, vector<4x128xf32>
    %c0_60 = arith.constant 0 : index
    %c0_61 = arith.constant 0 : index
    %106 = vector.load %arg9[%c0_60, %c0_61] : memref<4x128xf32, #tpu.memory_space<vmem>>, vector<4x128xf32>
    %cst_62 = arith.constant 0.000000e+00 : f32
    %107 = vector.broadcast %cst_62 : f32 to vector<4x128xf32>
    %108 = arith.maximumf %105, %107 : vector<4x128xf32>
    %109 = arith.mulf %105, %106 : vector<4x128xf32>
    %110 = arith.subf %108, %109 : vector<4x128xf32>
    %111 = math.absf %105 : vector<4x128xf32>
    %cst_63 = arith.constant 0.000000e+00 : f32
    %112 = vector.broadcast %cst_63 : f32 to vector<4x128xf32>
    %113 = arith.subf %112, %111 : vector<4x128xf32>
    %114 = math.exp %113 : vector<4x128xf32>
    %115 = math.log1p %114 : vector<4x128xf32>
    %116 = arith.addf %110, %115 : vector<4x128xf32>
    %cst_64 = arith.constant 0.000000e+00 : f32
    %117 = vector.broadcast %cst_64 : f32 to vector<4x128xf32>
    %118 = arith.select %104, %116, %117 : vector<4x128xi1>, vector<4x128xf32>
    %c0_65 = arith.constant 0 : index
    %c40 = arith.constant 40 : index
    %c0_66 = arith.constant 0 : index
    %119 = vector.load %arg14[%c0_65, %c40, %c0_66] : memref<1x64x128xf32, #tpu.memory_space<vmem>>, vector<1x1x128xf32>
    %120 = vector.shape_cast %119 : vector<1x1x128xf32> to vector<1x128xf32>
    %cst_67 = arith.constant dense<0.000000e+00> : vector<128xf32>
    %121 = vector.multi_reduction <add>, %118, %cst_67 [0] : vector<4x128xf32> to vector<128xf32>
    %122 = vector.shape_cast %121 : vector<128xf32> to vector<1x128xf32>
    %123 = arith.addf %120, %122 : vector<1x128xf32>
    %c0_68 = arith.constant 0 : index
    %c40_69 = arith.constant 40 : index
    %c0_70 = arith.constant 0 : index
    %124 = vector.load %arg14[%c0_68, %c40_69, %c0_70] : memref<1x64x128xf32, #tpu.memory_space<vmem>>, vector<1x1x128xf32>
    %125 = vector.shape_cast %124 : vector<1x1x128xf32> to vector<1x128xf32>
    %126 = vector.shape_cast %123 : vector<1x128xf32> to vector<1x1x128xf32>
    tpu.vector_store %arg14[%c0_68, %c40_69, %c0_70], %126 {strides = array<i32>} : memref<1x64x128xf32, #tpu.memory_space<vmem>>, vector<1x1x128xf32>,
    %c4_i32_71 = arith.constant 4 : i32
    %127 = arith.muli %1, %c4_i32_71 : i32
    %c4_i32_72 = arith.constant 4 : i32
    %128 = arith.subi %c4_i32_72, %127 : i32
    %129 = tpu.iota {dimensions = array<i32: 0>} : vector<4x128xi32>
    %130 = vector.broadcast %128 : i32 to vector<4x128xi32>
    %131 = arith.cmpi slt, %129, %130 : vector<4x128xi32>
    %c0_73 = arith.constant 0 : index
    %c0_74 = arith.constant 0 : index
    %132 = vector.load %arg10[%c0_73, %c0_74] : memref<4x128xf32, #tpu.memory_space<vmem>>, vector<4x128xf32>
    %c0_75 = arith.constant 0 : index
    %c0_76 = arith.constant 0 : index
    %133 = vector.load %arg11[%c0_75, %c0_76] : memref<4x128xf32, #tpu.memory_space<vmem>>, vector<4x128xf32>
    %cst_77 = arith.constant 0.000000e+00 : f32
    %134 = vector.broadcast %cst_77 : f32 to vector<4x128xf32>
    %135 = arith.maximumf %132, %134 : vector<4x128xf32>
    %136 = arith.mulf %132, %133 : vector<4x128xf32>
    %137 = arith.subf %135, %136 : vector<4x128xf32>
    %138 = math.absf %132 : vector<4x128xf32>
    %cst_78 = arith.constant 0.000000e+00 : f32
    %139 = vector.broadcast %cst_78 : f32 to vector<4x128xf32>
    %140 = arith.subf %139, %138 : vector<4x128xf32>
    %141 = math.exp %140 : vector<4x128xf32>
    %142 = math.log1p %141 : vector<4x128xf32>
    %143 = arith.addf %137, %142 : vector<4x128xf32>
    %cst_79 = arith.constant 0.000000e+00 : f32
    %144 = vector.broadcast %cst_79 : f32 to vector<4x128xf32>
    %145 = arith.select %131, %143, %144 : vector<4x128xi1>, vector<4x128xf32>
    %c0_80 = arith.constant 0 : index
    %c48 = arith.constant 48 : index
    %c0_81 = arith.constant 0 : index
    %146 = vector.load %arg14[%c0_80, %c48, %c0_81] : memref<1x64x128xf32, #tpu.memory_space<vmem>>, vector<1x1x128xf32>
    %147 = vector.shape_cast %146 : vector<1x1x128xf32> to vector<1x128xf32>
    %cst_82 = arith.constant dense<0.000000e+00> : vector<128xf32>
    %148 = vector.multi_reduction <add>, %145, %cst_82 [0] : vector<4x128xf32> to vector<128xf32>
    %149 = vector.shape_cast %148 : vector<128xf32> to vector<1x128xf32>
    %150 = arith.addf %147, %149 : vector<1x128xf32>
    %c0_83 = arith.constant 0 : index
    %c48_84 = arith.constant 48 : index
    %c0_85 = arith.constant 0 : index
    %151 = vector.load %arg14[%c0_83, %c48_84, %c0_85] : memref<1x64x128xf32, #tpu.memory_space<vmem>>, vector<1x1x128xf32>
    %152 = vector.shape_cast %151 : vector<1x1x128xf32> to vector<1x128xf32>
    %153 = vector.shape_cast %150 : vector<1x128xf32> to vector<1x1x128xf32>
    tpu.vector_store %arg14[%c0_83, %c48_84, %c0_85], %153 {strides = array<i32>} : memref<1x64x128xf32, #tpu.memory_space<vmem>>, vector<1x1x128xf32>,
    %c8_i32 = arith.constant 8 : i32
    %154 = arith.muli %1, %c8_i32 : i32
    %c8_i32_86 = arith.constant 8 : i32
    %155 = arith.subi %c8_i32_86, %154 : i32
    %156 = tpu.iota {dimensions = array<i32: 0>} : vector<8x128xi32>
    %157 = vector.broadcast %155 : i32 to vector<8x128xi32>
    %158 = arith.cmpi slt, %156, %157 : vector<8x128xi32>
    %c0_87 = arith.constant 0 : index
    %c0_88 = arith.constant 0 : index
    %159 = vector.load %arg12[%c0_87, %c0_88] : memref<8x128xf32, #tpu.memory_space<vmem>>, vector<8x128xf32>
    %c0_89 = arith.constant 0 : index
    %c0_90 = arith.constant 0 : index
    %160 = vector.load %arg13[%c0_89, %c0_90] : memref<8x128xf32, #tpu.memory_space<vmem>>, vector<8x128xf32>
    %161 = arith.subf %159, %160 : vector<8x128xf32>
    %162 = arith.mulf %161, %161 : vector<8x128xf32>
    %cst_91 = arith.constant 0.000000e+00 : f32
    %163 = vector.broadcast %cst_91 : f32 to vector<8x128xf32>
    %164 = arith.select %158, %162, %163 : vector<8x128xi1>, vector<8x128xf32>
    %165 = vector.shape_cast %164 : vector<8x128xf32> to vector<1x8x128xf32>
    %cst_92 = arith.constant dense<0.000000e+00> : vector<8x128xf32>
    %166 = vector.multi_reduction <add>, %165, %cst_92 [0] : vector<1x8x128xf32> to vector<8x128xf32>
    %c0_93 = arith.constant 0 : index
    %c56 = arith.constant 56 : index
    %c0_94 = arith.constant 0 : index
    %167 = vector.load %arg14[%c0_93, %c56, %c0_94] : memref<1x64x128xf32, #tpu.memory_space<vmem>>, vector<1x8x128xf32>
    %168 = vector.shape_cast %167 : vector<1x8x128xf32> to vector<8x128xf32>
    %169 = arith.addf %168, %166 : vector<8x128xf32>
    %c0_95 = arith.constant 0 : index
    %c56_96 = arith.constant 56 : index
    %c0_97 = arith.constant 0 : index
    %170 = vector.load %arg14[%c0_95, %c56_96, %c0_97] : memref<1x64x128xf32, #tpu.memory_space<vmem>>, vector<1x8x128xf32>
    %171 = vector.shape_cast %170 : vector<1x8x128xf32> to vector<8x128xf32>
    %172 = vector.shape_cast %169 : vector<8x128xf32> to vector<1x8x128xf32>
    tpu.vector_store %arg14[%c0_95, %c56_96, %c0_97], %172 {strides = array<i32>} : memref<1x64x128xf32, #tpu.memory_space<vmem>>, vector<1x8x128xf32>,
    return
  }
  func.func @transform_0(%arg0: i32, %arg1: i32) -> (i32, i32) {
    %c1_i32 = arith.constant 1 : i32
    %0 = arith.muli %arg0, %c1_i32 : i32
    %1 = arith.addi %0, %arg1 : i32
    %c0_i32 = arith.constant 0 : i32
    %2 = arith.minsi %1, %c0_i32 : i32
    %c0_i32_0 = arith.constant 0 : i32
    %c0_i32_1 = arith.constant 0 : i32
    return %2, %c0_i32_0 : i32, i32
  }
  func.func @transform_1(%arg0: i32, %arg1: i32) -> (i32, i32) {
    %c1_i32 = arith.constant 1 : i32
    %0 = arith.muli %arg0, %c1_i32 : i32
    %1 = arith.addi %0, %arg1 : i32
    %c0_i32 = arith.constant 0 : i32
    %2 = arith.minsi %1, %c0_i32 : i32
    %c0_i32_0 = arith.constant 0 : i32
    %c0_i32_1 = arith.constant 0 : i32
    return %2, %c0_i32_0 : i32, i32
  }
  func.func @transform_2(%arg0: i32, %arg1: i32) -> (i32, i32) {
    %c1_i32 = arith.constant 1 : i32
    %0 = arith.muli %arg0, %c1_i32 : i32
    %1 = arith.addi %0, %arg1 : i32
    %c0_i32 = arith.constant 0 : i32
    %2 = arith.minsi %1, %c0_i32 : i32
    %c0_i32_0 = arith.constant 0 : i32
    %c0_i32_1 = arith.constant 0 : i32
    return %2, %c0_i32_0 : i32, i32
  }
  func.func @transform_3(%arg0: i32, %arg1: i32) -> (i32, i32) {
    %c1_i32 = arith.constant 1 : i32
    %0 = arith.muli %arg0, %c1_i32 : i32
    %1 = arith.addi %0, %arg1 : i32
    %c0_i32 = arith.constant 0 : i32
    %2 = arith.minsi %1, %c0_i32 : i32
    %c0_i32_0 = arith.constant 0 : i32
    %c0_i32_1 = arith.constant 0 : i32
    return %2, %c0_i32_0 : i32, i32
  }
  func.func @transform_4(%arg0: i32, %arg1: i32) -> (i32, i32) {
    %c1_i32 = arith.constant 1 : i32
    %0 = arith.muli %arg0, %c1_i32 : i32
    %1 = arith.addi %0, %arg1 : i32
    %c0_i32 = arith.constant 0 : i32
    %2 = arith.minsi %1, %c0_i32 : i32
    %c0_i32_0 = arith.constant 0 : i32
    %c0_i32_1 = arith.constant 0 : i32
    return %2, %c0_i32_0 : i32, i32
  }
  func.func @transform_5(%arg0: i32, %arg1: i32) -> (i32, i32) {
    %c1_i32 = arith.constant 1 : i32
    %0 = arith.muli %arg0, %c1_i32 : i32
    %1 = arith.addi %0, %arg1 : i32
    %c0_i32 = arith.constant 0 : i32
    %2 = arith.minsi %1, %c0_i32 : i32
    %c0_i32_0 = arith.constant 0 : i32
    %c0_i32_1 = arith.constant 0 : i32
    return %2, %c0_i32_0 : i32, i32
  }
  func.func @transform_6(%arg0: i32, %arg1: i32) -> (i32, i32) {
    %c1_i32 = arith.constant 1 : i32
    %0 = arith.muli %arg0, %c1_i32 : i32
    %1 = arith.addi %0, %arg1 : i32
    %c0_i32 = arith.constant 0 : i32
    %2 = arith.minsi %1, %c0_i32 : i32
    %c0_i32_0 = arith.constant 0 : i32
    %c0_i32_1 = arith.constant 0 : i32
    return %2, %c0_i32_0 : i32, i32
  }
  func.func @transform_7(%arg0: i32, %arg1: i32) -> (i32, i32) {
    %c1_i32 = arith.constant 1 : i32
    %0 = arith.muli %arg0, %c1_i32 : i32
    %1 = arith.addi %0, %arg1 : i32
    %c0_i32 = arith.constant 0 : i32
    %2 = arith.minsi %1, %c0_i32 : i32
    %c0_i32_0 = arith.constant 0 : i32
    %c0_i32_1 = arith.constant 0 : i32
    return %2, %c0_i32_0 : i32, i32
  }
  func.func @transform_8(%arg0: i32, %arg1: i32) -> (i32, i32) {
    %c1_i32 = arith.constant 1 : i32
    %0 = arith.muli %arg0, %c1_i32 : i32
    %1 = arith.addi %0, %arg1 : i32
    %c0_i32 = arith.constant 0 : i32
    %2 = arith.minsi %1, %c0_i32 : i32
    %c0_i32_0 = arith.constant 0 : i32
    %c0_i32_1 = arith.constant 0 : i32
    return %2, %c0_i32_0 : i32, i32
  }
  func.func @transform_9(%arg0: i32, %arg1: i32) -> (i32, i32) {
    %c1_i32 = arith.constant 1 : i32
    %0 = arith.muli %arg0, %c1_i32 : i32
    %1 = arith.addi %0, %arg1 : i32
    %c0_i32 = arith.constant 0 : i32
    %2 = arith.minsi %1, %c0_i32 : i32
    %c0_i32_0 = arith.constant 0 : i32
    %c0_i32_1 = arith.constant 0 : i32
    return %2, %c0_i32_0 : i32, i32
  }
  func.func @transform_10(%arg0: i32, %arg1: i32) -> (i32, i32) {
    %c1_i32 = arith.constant 1 : i32
    %0 = arith.muli %arg0, %c1_i32 : i32
    %1 = arith.addi %0, %arg1 : i32
    %c0_i32 = arith.constant 0 : i32
    %2 = arith.minsi %1, %c0_i32 : i32
    %c0_i32_0 = arith.constant 0 : i32
    %c0_i32_1 = arith.constant 0 : i32
    return %2, %c0_i32_0 : i32, i32
  }
  func.func @transform_11(%arg0: i32, %arg1: i32) -> (i32, i32) {
    %c1_i32 = arith.constant 1 : i32
    %0 = arith.muli %arg0, %c1_i32 : i32
    %1 = arith.addi %0, %arg1 : i32
    %c0_i32 = arith.constant 0 : i32
    %2 = arith.minsi %1, %c0_i32 : i32
    %c0_i32_0 = arith.constant 0 : i32
    %c0_i32_1 = arith.constant 0 : i32
    return %2, %c0_i32_0 : i32, i32
  }
  func.func @transform_12(%arg0: i32, %arg1: i32) -> (i32, i32, i32) {
    %c0_i32 = arith.constant 0 : i32
    %c0_i32_0 = arith.constant 0 : i32
    %c0_i32_1 = arith.constant 0 : i32
    return %arg0, %c0_i32, %c0_i32_0 : i32, i32, i32
  }
}

</mosaic_0001>

<llo_original>
// kernel: _topo_loss_full.1
$region0: #{_topo_loss_full.1}
  #allocation0 [shape = 'u32[]', space=smem, size = 0x4, offset = 0x4, fixed_abs, tag = 'smem constant byte address 0x4 - core index']
  #allocation1 [shape = 'u32[72,128]{1,0:T(1,128)}', space=vmem, size = 0x9000, scoped, tag = 'internal scratch']
  %s0 = inlined_call_operand.vmem [shape: f32[4,128], index: 0, kind: input, shape index: {}]
  %s1 = inlined_call_operand.vmem [shape: f32[4,128], index: 1, kind: input, shape index: {}]
  %s2 = inlined_call_operand.vmem [shape: f32[4,128], index: 2, kind: input, shape index: {}]
  %s3 = inlined_call_operand.vmem [shape: f32[4,128], index: 3, kind: input, shape index: {}]
  %s4 = inlined_call_operand.vmem [shape: f32[4,128], index: 4, kind: input, shape index: {}]
  %s5 = inlined_call_operand.vmem [shape: f32[4,128], index: 5, kind: input, shape index: {}]
  %s6 = inlined_call_operand.vmem [shape: f32[4,128], index: 6, kind: input, shape index: {}]
  %s7 = inlined_call_operand.vmem [shape: f32[4,128], index: 7, kind: input, shape index: {}]
  %s8 = inlined_call_operand.vmem [shape: f32[4,128], index: 8, kind: input, shape index: {}]
  %s9 = inlined_call_operand.vmem [shape: f32[4,128], index: 9, kind: input, shape index: {}]
  %s10 = inlined_call_operand.vmem [shape: f32[8,128], index: 10, kind: input, shape index: {}]
  %s11 = inlined_call_operand.vmem [shape: f32[8,128], index: 11, kind: input, shape index: {}]
  %s12 = inlined_call_operand.vmem [shape: f32[2,64,128], index: 12, kind: output, shape index: {}]
  %s13 = sld [smem:[#allocation0]]
  $region85: #{_topo_loss_full.1} parent=0
    _
  %s15 = ssub.s32 1, %s13
  %s16 = scalar_select 0, %s15, %s13
  loop: start=0, step=1, limit=4
  $region2: #{_topo_loss_full.1} parent=0 // loop_pre_header
    _
  $region3: #{_topo_loss_full.1} parent=0 // loop_header
    %s18 = sphi 0, %s22
    %p19 = scmp.ge.s32.totalorder %s18, 4
    %s25 = sphi 0, %s37
    %s26 = sphi 0, %s33
    %s27 = sphi 0, %s25
    %s28 = sphi 0, %s26
    %s29 = sphi 0, %s27
    %s30 = sphi 0, %s28
    %s46 = sphi 0, %s48
    %s49 = sphi 0, %s46
    %s50 = sphi 0, %s49
    %s66 = sphi 0, %s50
    %s78 = sphi 0, %s80
    %s81 = sphi 0, %s78
    %s82 = sphi 0, %s81
    %s98 = sphi 0, %s82
    %s110 = sphi 0, %s112
    %s113 = sphi 0, %s110
    %s114 = sphi 0, %s113
    %s130 = sphi 0, %s114
    %s142 = sphi 0, %s144
    %s145 = sphi 0, %s142
    %s146 = sphi 0, %s145
    %s162 = sphi 0, %s146
    %s174 = sphi 0, %s176
    %s177 = sphi 0, %s174
    %s178 = sphi 0, %s177
    %s194 = sphi 0, %s178
    %s206 = sphi 0, %s208
    %s209 = sphi 0, %s206
    %s210 = sphi 0, %s209
    %s226 = sphi 0, %s210
    %s238 = sphi 0, %s240
    %s241 = sphi 0, %s238
    %s242 = sphi 0, %s241
    %s258 = sphi 0, %s242
    %s270 = sphi 0, %s272
    %s273 = sphi 0, %s270
    %s274 = sphi 0, %s273
    %s290 = sphi 0, %s274
    %s302 = sphi 0, %s304
    %s305 = sphi 0, %s302
    %s306 = sphi 0, %s305
    %s322 = sphi 0, %s306
    %s334 = sphi 0, %s336
    %s337 = sphi 0, %s334
    %s338 = sphi 0, %s337
    %s354 = sphi 0, %s338
    %s366 = sphi 0, %s368
    %s369 = sphi 0, %s366
    %s370 = sphi 0, %s369
    %s386 = sphi 0, %s370
    %s398 = sphi 0, %s400
    %s401 = sphi 0, %s398
    %s402 = sphi 0, %s401
    %s418 = sphi 0, %s402
    %s424 = sphi 0, %s426
    %s427 = sphi 0, %s424
    %s428 = sphi 0, %s427
    %s444 = sphi 0, %s428
  $region4: #{_topo_loss_full.1} parent=0 // loop_header_branch
    %21 = sbr.rel (%p19) target = $region8
  $region5: #{_topo_loss_full.1} parent=0 // loop_body
    %s23 = ssub.s32 %s18, 1
    %s24 = ssub.s32 %s18, 2
    %s31 = sadd.s32 1, %s26
    %p32 = scmp.ge.s32.totalorder %s31, 1
    %s33 = scalar_select %p32, 0, %s31
    %s34 = sadd.s32 1, %s25
    %s35 = scalar_select %p32, %s34, %s25
    %p36 = scmp.ge.s32.totalorder %s35, 2
    %s37 = scalar_select %p36, 0, %s35
    %s38 = sadd.s32 %s25, %s26
    %p39 = scmp.lt.s32.totalorder %s38, 0
    %s40 = scalar_select %p39, %s38, 0
    %s41 = sadd.s32 %s37, %s33
    %p42 = scmp.lt.s32.totalorder %s41, 0
    %s43 = scalar_select %p42, %s41, 0
    %s44 = ssub.s32 %s40, %s43
    %p45 = scmp.eq.s32.totalorder %s44, 0
    %s47 = sadd.s32 %s46, 1
    %s48 = scalar_select %p45, %s46, %s47
    %p51 = pneg %p45
    %p52 = scmp.eq.s32.totalorder %s18, 1
    %p53 = por %p51, %p52
    %p54 = scmp.ne.s32.totalorder %s46, %s49
    %p55 = scmp.eq.s32.totalorder %s18, 0
    %p56 = por %p54, %p55
    %p57 = scmp.ne.s32.totalorder %s46, %s49
    %p58 = scmp.eq.s32.totalorder %s23, 1
    %p59 = por %p57, %p58
    %p60 = scmp.ne.s32.totalorder %s49, %s50
    %p61 = scmp.eq.s32.totalorder %s23, 0
    %p62 = por %p60, %p61
    %p63 = scmp.ne.s32.totalorder %s49, %s50
    %p64 = scmp.eq.s32.totalorder %s24, 1
    %p65 = por %p63, %p64
    %p67 = scmp.ne.s32.totalorder %s50, %s66
    %p68 = scmp.eq.s32.totalorder %s24, 0
    %p69 = por %p67, %p68
    %s70 = sadd.s32 %s25, %s26
    %p71 = scmp.lt.s32.totalorder %s70, 0
    %s72 = scalar_select %p71, %s70, 0
    %s73 = sadd.s32 %s37, %s33
    %p74 = scmp.lt.s32.totalorder %s73, 0
    %s75 = scalar_select %p74, %s73, 0
    %s76 = ssub.s32 %s72, %s75
    %p77 = scmp.eq.s32.totalorder %s76, 0
    %s79 = sadd.s32 %s78, 1
    %s80 = scalar_select %p77, %s78, %s79
    %p83 = pneg %p77
    %p84 = scmp.eq.s32.totalorder %s18, 1
    %p85 = por %p83, %p84
    %p86 = scmp.ne.s32.totalorder %s78, %s81
    %p87 = scmp.eq.s32.totalorder %s18, 0
    %p88 = por %p86, %p87
    %p89 = scmp.ne.s32.totalorder %s78, %s81
    %p90 = scmp.eq.s32.totalorder %s23, 1
    %p91 = por %p89, %p90
    %p92 = scmp.ne.s32.totalorder %s81, %s82
    %p93 = scmp.eq.s32.totalorder %s23, 0
    %p94 = por %p92, %p93
    %p95 = scmp.ne.s32.totalorder %s81, %s82
    %p96 = scmp.eq.s32.totalorder %s24, 1
    %p97 = por %p95, %p96
    %p99 = scmp.ne.s32.totalorder %s82, %s98
    %p100 = scmp.eq.s32.totalorder %s24, 0
    %p101 = por %p99, %p100
    %s102 = sadd.s32 %s25, %s26
    %p103 = scmp.lt.s32.totalorder %s102, 0
    %s104 = scalar_select %p103, %s102, 0
    %s105 = sadd.s32 %s37, %s33
    %p106 = scmp.lt.s32.totalorder %s105, 0
    %s107 = scalar_select %p106, %s105, 0
    %s108 = ssub.s32 %s104, %s107
    %p109 = scmp.eq.s32.totalorder %s108, 0
    %s111 = sadd.s32 %s110, 1
    %s112 = scalar_select %p109, %s110, %s111
    %p115 = pneg %p109
    %p116 = scmp.eq.s32.totalorder %s18, 1
    %p117 = por %p115, %p116
    %p118 = scmp.ne.s32.totalorder %s110, %s113
    %p119 = scmp.eq.s32.totalorder %s18, 0
    %p120 = por %p118, %p119
    %p121 = scmp.ne.s32.totalorder %s110, %s113
    %p122 = scmp.eq.s32.totalorder %s23, 1
    %p123 = por %p121, %p122
    %p124 = scmp.ne.s32.totalorder %s113, %s114
    %p125 = scmp.eq.s32.totalorder %s23, 0
    %p126 = por %p124, %p125
    %p127 = scmp.ne.s32.totalorder %s113, %s114
    %p128 = scmp.eq.s32.totalorder %s24, 1
    %p129 = por %p127, %p128
    %p131 = scmp.ne.s32.totalorder %s114, %s130
    %p132 = scmp.eq.s32.totalorder %s24, 0
    %p133 = por %p131, %p132
    %s134 = sadd.s32 %s25, %s26
    %p135 = scmp.lt.s32.totalorder %s134, 0
    %s136 = scalar_select %p135, %s134, 0
    %s137 = sadd.s32 %s37, %s33
    %p138 = scmp.lt.s32.totalorder %s137, 0
    %s139 = scalar_select %p138, %s137, 0
    %s140 = ssub.s32 %s136, %s139
    %p141 = scmp.eq.s32.totalorder %s140, 0
    %s143 = sadd.s32 %s142, 1
    %s144 = scalar_select %p141, %s142, %s143
    %p147 = pneg %p141
    %p148 = scmp.eq.s32.totalorder %s18, 1
    %p149 = por %p147, %p148
    %p150 = scmp.ne.s32.totalorder %s142, %s145
    %p151 = scmp.eq.s32.totalorder %s18, 0
    %p152 = por %p150, %p151
    %p153 = scmp.ne.s32.totalorder %s142, %s145
    %p154 = scmp.eq.s32.totalorder %s23, 1
    %p155 = por %p153, %p154
    %p156 = scmp.ne.s32.totalorder %s145, %s146
    %p157 = scmp.eq.s32.totalorder %s23, 0
    %p158 = por %p156, %p157
    %p159 = scmp.ne.s32.totalorder %s145, %s146
    %p160 = scmp.eq.s32.totalorder %s24, 1
    %p161 = por %p159, %p160
    %p163 = scmp.ne.s32.totalorder %s146, %s162
    %p164 = scmp.eq.s32.totalorder %s24, 0
    %p165 = por %p163, %p164
    %s166 = sadd.s32 %s25, %s26
    %p167 = scmp.lt.s32.totalorder %s166, 0
    %s168 = scalar_select %p167, %s166, 0
    %s169 = sadd.s32 %s37, %s33
    %p170 = scmp.lt.s32.totalorder %s169, 0
    %s171 = scalar_select %p170, %s169, 0
    %s172 = ssub.s32 %s168, %s171
    %p173 = scmp.eq.s32.totalorder %s172, 0
    %s175 = sadd.s32 %s174, 1
    %s176 = scalar_select %p173, %s174, %s175
    %p179 = pneg %p173
    %p180 = scmp.eq.s32.totalorder %s18, 1
    %p181 = por %p179, %p180
    %p182 = scmp.ne.s32.totalorder %s174, %s177
    %p183 = scmp.eq.s32.totalorder %s18, 0
    %p184 = por %p182, %p183
    %p185 = scmp.ne.s32.totalorder %s174, %s177
    %p186 = scmp.eq.s32.totalorder %s23, 1
    %p187 = por %p185, %p186
    %p188 = scmp.ne.s32.totalorder %s177, %s178
    %p189 = scmp.eq.s32.totalorder %s23, 0
    %p190 = por %p188, %p189
    %p191 = scmp.ne.s32.totalorder %s177, %s178
    %p192 = scmp.eq.s32.totalorder %s24, 1
    %p193 = por %p191, %p192
    %p195 = scmp.ne.s32.totalorder %s178, %s194
    %p196 = scmp.eq.s32.totalorder %s24, 0
    %p197 = por %p195, %p196
    %s198 = sadd.s32 %s25, %s26
    %p199 = scmp.lt.s32.totalorder %s198, 0
    %s200 = scalar_select %p199, %s198, 0
    %s201 = sadd.s32 %s37, %s33
    %p202 = scmp.lt.s32.totalorder %s201, 0
    %s203 = scalar_select %p202, %s201, 0
    %s204 = ssub.s32 %s200, %s203
    %p205 = scmp.eq.s32.totalorder %s204, 0
    %s207 = sadd.s32 %s206, 1
    %s208 = scalar_select %p205, %s206, %s207
    %p211 = pneg %p205
    %p212 = scmp.eq.s32.totalorder %s18, 1
    %p213 = por %p211, %p212
    %p214 = scmp.ne.s32.totalorder %s206, %s209
    %p215 = scmp.eq.s32.totalorder %s18, 0
    %p216 = por %p214, %p215
    %p217 = scmp.ne.s32.totalorder %s206, %s209
    %p218 = scmp.eq.s32.totalorder %s23, 1
    %p219 = por %p217, %p218
    %p220 = scmp.ne.s32.totalorder %s209, %s210
    %p221 = scmp.eq.s32.totalorder %s23, 0
    %p222 = por %p220, %p221
    %p223 = scmp.ne.s32.totalorder %s209, %s210
    %p224 = scmp.eq.s32.totalorder %s24, 1
    %p225 = por %p223, %p224
    %p227 = scmp.ne.s32.totalorder %s210, %s226
    %p228 = scmp.eq.s32.totalorder %s24, 0
    %p229 = por %p227, %p228
    %s230 = sadd.s32 %s25, %s26
    %p231 = scmp.lt.s32.totalorder %s230, 0
    %s232 = scalar_select %p231, %s230, 0
    %s233 = sadd.s32 %s37, %s33
    %p234 = scmp.lt.s32.totalorder %s233, 0
    %s235 = scalar_select %p234, %s233, 0
    %s236 = ssub.s32 %s232, %s235
    %p237 = scmp.eq.s32.totalorder %s236, 0
    %s239 = sadd.s32 %s238, 1
    %s240 = scalar_select %p237, %s238, %s239
    %p243 = pneg %p237
    %p244 = scmp.eq.s32.totalorder %s18, 1
    %p245 = por %p243, %p244
    %p246 = scmp.ne.s32.totalorder %s238, %s241
    %p247 = scmp.eq.s32.totalorder %s18, 0
    %p248 = por %p246, %p247
    %p249 = scmp.ne.s32.totalorder %s238, %s241
    %p250 = scmp.eq.s32.totalorder %s23, 1
    %p251 = por %p249, %p250
    %p252 = scmp.ne.s32.totalorder %s241, %s242
    %p253 = scmp.eq.s32.totalorder %s23, 0
    %p254 = por %p252, %p253
    %p255 = scmp.ne.s32.totalorder %s241, %s242
    %p256 = scmp.eq.s32.totalorder %s24, 1
    %p257 = por %p255, %p256
    %p259 = scmp.ne.s32.totalorder %s242, %s258
    %p260 = scmp.eq.s32.totalorder %s24, 0
    %p261 = por %p259, %p260
    %s262 = sadd.s32 %s25, %s26
    %p263 = scmp.lt.s32.totalorder %s262, 0
    %s264 = scalar_select %p263, %s262, 0
    %s265 = sadd.s32 %s37, %s33
    %p266 = scmp.lt.s32.totalorder %s265, 0
    %s267 = scalar_select %p266, %s265, 0
    %s268 = ssub.s32 %s264, %s267
    %p269 = scmp.eq.s32.totalorder %s268, 0
    %s271 = sadd.s32 %s270, 1
    %s272 = scalar_select %p269, %s270, %s271
    %p275 = pneg %p269
    %p276 = scmp.eq.s32.totalorder %s18, 1
    %p277 = por %p275, %p276
    %p278 = scmp.ne.s32.totalorder %s270, %s273
    %p279 = scmp.eq.s32.totalorder %s18, 0
    %p280 = por %p278, %p279
    %p281 = scmp.ne.s32.totalorder %s270, %s273
    %p282 = scmp.eq.s32.totalorder %s23, 1
    %p283 = por %p281, %p282
    %p284 = scmp.ne.s32.totalorder %s273, %s274
    %p285 = scmp.eq.s32.totalorder %s23, 0
    %p286 = por %p284, %p285
    %p287 = scmp.ne.s32.totalorder %s273, %s274
    %p288 = scmp.eq.s32.totalorder %s24, 1
    %p289 = por %p287, %p288
    %p291 = scmp.ne.s32.totalorder %s274, %s290
    %p292 = scmp.eq.s32.totalorder %s24, 0
    %p293 = por %p291, %p292
    %s294 = sadd.s32 %s25, %s26
    %p295 = scmp.lt.s32.totalorder %s294, 0
    %s296 = scalar_select %p295, %s294, 0
    %s297 = sadd.s32 %s37, %s33
    %p298 = scmp.lt.s32.totalorder %s297, 0
    %s299 = scalar_select %p298, %s297, 0
    %s300 = ssub.s32 %s296, %s299
    %p301 = scmp.eq.s32.totalorder %s300, 0
    %s303 = sadd.s32 %s302, 1
    %s304 = scalar_select %p301, %s302, %s303
    %p307 = pneg %p301
    %p308 = scmp.eq.s32.totalorder %s18, 1
    %p309 = por %p307, %p308
    %p310 = scmp.ne.s32.totalorder %s302, %s305
    %p311 = scmp.eq.s32.totalorder %s18, 0
    %p312 = por %p310, %p311
    %p313 = scmp.ne.s32.totalorder %s302, %s305
    %p314 = scmp.eq.s32.totalorder %s23, 1
    %p315 = por %p313, %p314
    %p316 = scmp.ne.s32.totalorder %s305, %s306
    %p317 = scmp.eq.s32.totalorder %s23, 0
    %p318 = por %p316, %p317
    %p319 = scmp.ne.s32.totalorder %s305, %s306
    %p320 = scmp.eq.s32.totalorder %s24, 1
    %p321 = por %p319, %p320
    %p323 = scmp.ne.s32.totalorder %s306, %s322
    %p324 = scmp.eq.s32.totalorder %s24, 0
    %p325 = por %p323, %p324
    %s326 = sadd.s32 %s25, %s26
    %p327 = scmp.lt.s32.totalorder %s326, 0
    %s328 = scalar_select %p327, %s326, 0
    %s329 = sadd.s32 %s37, %s33
    %p330 = scmp.lt.s32.totalorder %s329, 0
    %s331 = scalar_select %p330, %s329, 0
    %s332 = ssub.s32 %s328, %s331
    %p333 = scmp.eq.s32.totalorder %s332, 0
    %s335 = sadd.s32 %s334, 1
    %s336 = scalar_select %p333, %s334, %s335
    %p339 = pneg %p333
    %p340 = scmp.eq.s32.totalorder %s18, 1
    %p341 = por %p339, %p340
    %p342 = scmp.ne.s32.totalorder %s334, %s337
    %p343 = scmp.eq.s32.totalorder %s18, 0
    %p344 = por %p342, %p343
    %p345 = scmp.ne.s32.totalorder %s334, %s337
    %p346 = scmp.eq.s32.totalorder %s23, 1
    %p347 = por %p345, %p346
    %p348 = scmp.ne.s32.totalorder %s337, %s338
    %p349 = scmp.eq.s32.totalorder %s23, 0
    %p350 = por %p348, %p349
    %p351 = scmp.ne.s32.totalorder %s337, %s338
    %p352 = scmp.eq.s32.totalorder %s24, 1
    %p353 = por %p351, %p352
    %p355 = scmp.ne.s32.totalorder %s338, %s354
    %p356 = scmp.eq.s32.totalorder %s24, 0
    %p357 = por %p355, %p356
    %s358 = sadd.s32 %s25, %s26
    %p359 = scmp.lt.s32.totalorder %s358, 0
    %s360 = scalar_select %p359, %s358, 0
    %s361 = sadd.s32 %s37, %s33
    %p362 = scmp.lt.s32.totalorder %s361, 0
    %s363 = scalar_select %p362, %s361, 0
    %s364 = ssub.s32 %s360, %s363
    %p365 = scmp.eq.s32.totalorder %s364, 0
    %s367 = sadd.s32 %s366, 1
    %s368 = scalar_select %p365, %s366, %s367
    %p371 = pneg %p365
    %p372 = scmp.eq.s32.totalorder %s18, 1
    %p373 = por %p371, %p372
    %p374 = scmp.ne.s32.totalorder %s366, %s369
    %p375 = scmp.eq.s32.totalorder %s18, 0
    %p376 = por %p374, %p375
    %p377 = scmp.ne.s32.totalorder %s366, %s369
    %p378 = scmp.eq.s32.totalorder %s23, 1
    %p379 = por %p377, %p378
    %p380 = scmp.ne.s32.totalorder %s369, %s370
    %p381 = scmp.eq.s32.totalorder %s23, 0
    %p382 = por %p380, %p381
    %p383 = scmp.ne.s32.totalorder %s369, %s370
    %p384 = scmp.eq.s32.totalorder %s24, 1
    %p385 = por %p383, %p384
    %p387 = scmp.ne.s32.totalorder %s370, %s386
    %p388 = scmp.eq.s32.totalorder %s24, 0
    %p389 = por %p387, %p388
    %s390 = sadd.s32 %s25, %s26
    %p391 = scmp.lt.s32.totalorder %s390, 0
    %s392 = scalar_select %p391, %s390, 0
    %s393 = sadd.s32 %s37, %s33
    %p394 = scmp.lt.s32.totalorder %s393, 0
    %s395 = scalar_select %p394, %s393, 0
    %s396 = ssub.s32 %s392, %s395
    %p397 = scmp.eq.s32.totalorder %s396, 0
    %s399 = sadd.s32 %s398, 1
    %s400 = scalar_select %p397, %s398, %s399
    %p403 = pneg %p397
    %p404 = scmp.eq.s32.totalorder %s18, 1
    %p405 = por %p403, %p404
    %p406 = scmp.ne.s32.totalorder %s398, %s401
    %p407 = scmp.eq.s32.totalorder %s18, 0
    %p408 = por %p406, %p407
    %p409 = scmp.ne.s32.totalorder %s398, %s401
    %p410 = scmp.eq.s32.totalorder %s23, 1
    %p411 = por %p409, %p410
    %p412 = scmp.ne.s32.totalorder %s401, %s402
    %p413 = scmp.eq.s32.totalorder %s23, 0
    %p414 = por %p412, %p413
    %p415 = scmp.ne.s32.totalorder %s401, %s402
    %p416 = scmp.eq.s32.totalorder %s24, 1
    %p417 = por %p415, %p416
    %p419 = scmp.ne.s32.totalorder %s402, %s418
    %p420 = scmp.eq.s32.totalorder %s24, 0
    %p421 = por %p419, %p420
    %s422 = ssub.s32 %s25, %s37
    %p423 = scmp.eq.s32.totalorder %s422, 0
    %s425 = sadd.s32 %s424, 1
    %s426 = scalar_select %p423, %s424, %s425
    %p429 = pneg %p423
    %p430 = scmp.eq.s32.totalorder %s18, 1
    %p431 = por %p429, %p430
    %p432 = scmp.ne.s32.totalorder %s424, %s427
    %p433 = scmp.eq.s32.totalorder %s18, 0
    %p434 = por %p432, %p433
    %p435 = scmp.ne.s32.totalorder %s424, %s427
    %p436 = scmp.eq.s32.totalorder %s23, 1
    %p437 = por %p435, %p436
    %p438 = scmp.ne.s32.totalorder %s427, %s428
    %p439 = scmp.eq.s32.totalorder %s23, 0
    %p440 = por %p438, %p439
    %p441 = scmp.ne.s32.totalorder %s427, %s428
    %p442 = scmp.eq.s32.totalorder %s24, 1
    %p443 = por %p441, %p442
    %p445 = scmp.ne.s32.totalorder %s428, %s444
    %p446 = scmp.eq.s32.totalorder %s24, 0
    %p447 = por %p445, %p446
    %p448 = scmp.le.s32.totalorder 1, %s18
    %p449 = scmp.lt.s32.totalorder %s18, 3
    %p450 = pnand %p448, %p449
    %p451 = pneg %p450
    // Predicated region
    $region9: #{_topo_loss_full.1} parent=5 // pred_check
      _
    $region10: #{_topo_loss_full.1} parent=5 // pred_check_branch
      %453 = sbr.rel (%p450) target = $region12
    $region11: #{_topo_loss_full.1} parent=5 // pred_region
      %s454 = ssub.s32 %s18, 1
    $region12: #{_topo_loss_full.1} parent=5 // pred_fallthru
      _
    %p455 = scmp.lt.s32.totalorder %s18, 2
    // Predicated region
    $region13: #{_topo_loss_full.1} parent=5 // pred_check
      %p456 = pneg %p455
    $region14: #{_topo_loss_full.1} parent=5 // pred_check_branch
      %458 = sbr.rel (%p456) target = $region16
    $region15: #{_topo_loss_full.1} parent=5 // pred_region
      // Predicated region
      $region17: #{_topo_loss_full.1} parent=15 // pred_check
        %p459 = pneg %p56
      $region18: #{_topo_loss_full.1} parent=15 // pred_check_branch
        %461 = sbr.rel (%p459) target = $region20
      $region19: #{_topo_loss_full.1} parent=15 // pred_region
        %s462 = sadd.s32 %s25, %s26
        %p463 = scmp.lt.s32.totalorder %s462, 0
        %s464 = scalar_select %p463, %s462, 0
        %p465 = scmp.lt.s32.totalorder %s464, 0
        %s466 = scalar_select %p465, %s464, 0
        %s467 = smul.addr %s466, 4
        %s468 = scalar_lea.vmem %s0, %s467
        %s469 = sadd.s32 %s25, %s26
        %p470 = scmp.lt.s32.totalorder %s469, 0
        %s471 = scalar_select %p470, %s469, 0
      $region20: #{_topo_loss_full.1} parent=15 // pred_fallthru
        _
      // Predicated region
      $region21: #{_topo_loss_full.1} parent=15 // pred_check
        %p472 = pneg %p88
      $region22: #{_topo_loss_full.1} parent=15 // pred_check_branch
        %474 = sbr.rel (%p472) target = $region24
      $region23: #{_topo_loss_full.1} parent=15 // pred_region
        %s475 = sadd.s32 %s25, %s26
        %p476 = scmp.lt.s32.totalorder %s475, 0
        %s477 = scalar_select %p476, %s475, 0
        %p478 = scmp.lt.s32.totalorder %s477, 0
        %s479 = scalar_select %p478, %s477, 0
        %s480 = smul.addr %s479, 4
        %s481 = scalar_lea.vmem %s1, %s480
        %s482 = sadd.s32 %s25, %s26
        %p483 = scmp.lt.s32.totalorder %s482, 0
        %s484 = scalar_select %p483, %s482, 0
      $region24: #{_topo_loss_full.1} parent=15 // pred_fallthru
        _
      // Predicated region
      $region25: #{_topo_loss_full.1} parent=15 // pred_check
        %p485 = pneg %p120
      $region26: #{_topo_loss_full.1} parent=15 // pred_check_branch
        %487 = sbr.rel (%p485) target = $region28
      $region27: #{_topo_loss_full.1} parent=15 // pred_region
        %s488 = sadd.s32 %s25, %s26
        %p489 = scmp.lt.s32.totalorder %s488, 0
        %s490 = scalar_select %p489, %s488, 0
        %p491 = scmp.lt.s32.totalorder %s490, 0
        %s492 = scalar_select %p491, %s490, 0
        %s493 = smul.addr %s492, 4
        %s494 = scalar_lea.vmem %s2, %s493
        %s495 = sadd.s32 %s25, %s26
        %p496 = scmp.lt.s32.totalorder %s495, 0
        %s497 = scalar_select %p496, %s495, 0
      $region28: #{_topo_loss_full.1} parent=15 // pred_fallthru
        _
      // Predicated region
      $region29: #{_topo_loss_full.1} parent=15 // pred_check
        %p498 = pneg %p152
      $region30: #{_topo_loss_full.1} parent=15 // pred_check_branch
        %500 = sbr.rel (%p498) target = $region32
      $region31: #{_topo_loss_full.1} parent=15 // pred_region
        %s501 = sadd.s32 %s25, %s26
        %p502 = scmp.lt.s32.totalorder %s501, 0
        %s503 = scalar_select %p502, %s501, 0
        %p504 = scmp.lt.s32.totalorder %s503, 0
        %s505 = scalar_select %p504, %s503, 0
        %s506 = smul.addr %s505, 4
        %s507 = scalar_lea.vmem %s3, %s506
        %s508 = sadd.s32 %s25, %s26
        %p509 = scmp.lt.s32.totalorder %s508, 0
        %s510 = scalar_select %p509, %s508, 0
      $region32: #{_topo_loss_full.1} parent=15 // pred_fallthru
        _
      // Predicated region
      $region33: #{_topo_loss_full.1} parent=15 // pred_check
        %p511 = pneg %p184
      $region34: #{_topo_loss_full.1} parent=15 // pred_check_branch
        %513 = sbr.rel (%p511) target = $region36
      $region35: #{_topo_loss_full.1} parent=15 // pred_region
        %s514 = sadd.s32 %s25, %s26
        %p515 = scmp.lt.s32.totalorder %s514, 0
        %s516 = scalar_select %p515, %s514, 0
        %p517 = scmp.lt.s32.totalorder %s516, 0
        %s518 = scalar_select %p517, %s516, 0
        %s519 = smul.addr %s518, 4
        %s520 = scalar_lea.vmem %s4, %s519
        %s521 = sadd.s32 %s25, %s26
        %p522 = scmp.lt.s32.totalorder %s521, 0
        %s523 = scalar_select %p522, %s521, 0
      $region36: #{_topo_loss_full.1} parent=15 // pred_fallthru
        _
      // Predicated region
      $region37: #{_topo_loss_full.1} parent=15 // pred_check
        %p524 = pneg %p216
      $region38: #{_topo_loss_full.1} parent=15 // pred_check_branch
        %526 = sbr.rel (%p524) target = $region40
      $region39: #{_topo_loss_full.1} parent=15 // pred_region
        %s527 = sadd.s32 %s25, %s26
        %p528 = scmp.lt.s32.totalorder %s527, 0
        %s529 = scalar_select %p528, %s527, 0
        %p530 = scmp.lt.s32.totalorder %s529, 0
        %s531 = scalar_select %p530, %s529, 0
        %s532 = smul.addr %s531, 4
        %s533 = scalar_lea.vmem %s5, %s532
        %s534 = sadd.s32 %s25, %s26
        %p535 = scmp.lt.s32.totalorder %s534, 0
        %s536 = scalar_select %p535, %s534, 0
      $region40: #{_topo_loss_full.1} parent=15 // pred_fallthru
        _
      // Predicated region
      $region41: #{_topo_loss_full.1} parent=15 // pred_check
        %p537 = pneg %p248
      $region42: #{_topo_loss_full.1} parent=15 // pred_check_branch
        %539 = sbr.rel (%p537) target = $region44
      $region43: #{_topo_loss_full.1} parent=15 // pred_region
        %s540 = sadd.s32 %s25, %s26
        %p541 = scmp.lt.s32.totalorder %s540, 0
        %s542 = scalar_select %p541, %s540, 0
        %p543 = scmp.lt.s32.totalorder %s542, 0
        %s544 = scalar_select %p543, %s542, 0
        %s545 = smul.addr %s544, 4
        %s546 = scalar_lea.vmem %s6, %s545
        %s547 = sadd.s32 %s25, %s26
        %p548 = scmp.lt.s32.totalorder %s547, 0
        %s549 = scalar_select %p548, %s547, 0
      $region44: #{_topo_loss_full.1} parent=15 // pred_fallthru
        _
      // Predicated region
      $region45: #{_topo_loss_full.1} parent=15 // pred_check
        %p550 = pneg %p280
      $region46: #{_topo_loss_full.1} parent=15 // pred_check_branch
        %552 = sbr.rel (%p550) target = $region48
      $region47: #{_topo_loss_full.1} parent=15 // pred_region
        %s553 = sadd.s32 %s25, %s26
        %p554 = scmp.lt.s32.totalorder %s553, 0
        %s555 = scalar_select %p554, %s553, 0
        %p556 = scmp.lt.s32.totalorder %s555, 0
        %s557 = scalar_select %p556, %s555, 0
        %s558 = smul.addr %s557, 4
        %s559 = scalar_lea.vmem %s7, %s558
        %s560 = sadd.s32 %s25, %s26
        %p561 = scmp.lt.s32.totalorder %s560, 0
        %s562 = scalar_select %p561, %s560, 0
      $region48: #{_topo_loss_full.1} parent=15 // pred_fallthru
        _
      // Predicated region
      $region49: #{_topo_loss_full.1} parent=15 // pred_check
        %p563 = pneg %p312
      $region50: #{_topo_loss_full.1} parent=15 // pred_check_branch
        %565 = sbr.rel (%p563) target = $region52
      $region51: #{_topo_loss_full.1} parent=15 // pred_region
        %s566 = sadd.s32 %s25, %s26
        %p567 = scmp.lt.s32.totalorder %s566, 0
        %s568 = scalar_select %p567, %s566, 0
        %p569 = scmp.lt.s32.totalorder %s568, 0
        %s570 = scalar_select %p569, %s568, 0
        %s571 = smul.addr %s570, 4
        %s572 = scalar_lea.vmem %s8, %s571
        %s573 = sadd.s32 %s25, %s26
        %p574 = scmp.lt.s32.totalorder %s573, 0
        %s575 = scalar_select %p574, %s573, 0
      $region52: #{_topo_loss_full.1} parent=15 // pred_fallthru
        _
      // Predicated region
      $region53: #{_topo_loss_full.1} parent=15 // pred_check
        %p576 = pneg %p344
      $region54: #{_topo_loss_full.1} parent=15 // pred_check_branch
        %578 = sbr.rel (%p576) target = $region56
      $region55: #{_topo_loss_full.1} parent=15 // pred_region
        %s579 = sadd.s32 %s25, %s26
        %p580 = scmp.lt.s32.totalorder %s579, 0
        %s581 = scalar_select %p580, %s579, 0
        %p582 = scmp.lt.s32.totalorder %s581, 0
        %s583 = scalar_select %p582, %s581, 0
        %s584 = smul.addr %s583, 4
        %s585 = scalar_lea.vmem %s9, %s584
        %s586 = sadd.s32 %s25, %s26
        %p587 = scmp.lt.s32.totalorder %s586, 0
        %s588 = scalar_select %p587, %s586, 0
      $region56: #{_topo_loss_full.1} parent=15 // pred_fallthru
        _
      // Predicated region
      $region57: #{_topo_loss_full.1} parent=15 // pred_check
        %p589 = pneg %p376
      $region58: #{_topo_loss_full.1} parent=15 // pred_check_branch
        %591 = sbr.rel (%p589) target = $region60
      $region59: #{_topo_loss_full.1} parent=15 // pred_region
        %s592 = sadd.s32 %s25, %s26
        %p593 = scmp.lt.s32.totalorder %s592, 0
        %s594 = scalar_select %p593, %s592, 0
        %p595 = scmp.lt.s32.totalorder %s594, 0
        %s596 = scalar_select %p595, %s594, 0
        %s597 = smul.addr %s596, 8
        %s598 = scalar_lea.vmem %s10, %s597
        %s599 = sadd.s32 %s25, %s26
        %p600 = scmp.lt.s32.totalorder %s599, 0
        %s601 = scalar_select %p600, %s599, 0
      $region60: #{_topo_loss_full.1} parent=15 // pred_fallthru
        _
      // Predicated region
      $region61: #{_topo_loss_full.1} parent=15 // pred_check
        %p602 = pneg %p408
      $region62: #{_topo_loss_full.1} parent=15 // pred_check_branch
        %604 = sbr.rel (%p602) target = $region64
      $region63: #{_topo_loss_full.1} parent=15 // pred_region
        %s605 = sadd.s32 %s25, %s26
        %p606 = scmp.lt.s32.totalorder %s605, 0
        %s607 = scalar_select %p606, %s605, 0
        %p608 = scmp.lt.s32.totalorder %s607, 0
        %s609 = scalar_select %p608, %s607, 0
        %s610 = smul.addr %s609, 8
        %s611 = scalar_lea.vmem %s11, %s610
        %s612 = sadd.s32 %s25, %s26
        %p613 = scmp.lt.s32.totalorder %s612, 0
        %s614 = scalar_select %p613, %s612, 0
      $region64: #{_topo_loss_full.1} parent=15 // pred_fallthru
        _
    $region16: #{_topo_loss_full.1} parent=5 // pred_fallthru
      _
    %p615 = scmp.le.s32.totalorder 1, %s18
    %p616 = scmp.lt.s32.totalorder %s18, 3
    %p617 = pnand %p615, %p616
    %p618 = pneg %p617
    // Predicated region
    $region65: #{_topo_loss_full.1} parent=5 // pred_check
      _
    $region66: #{_topo_loss_full.1} parent=5 // pred_check_branch
      %620 = sbr.rel (%p617) target = $region68
    $region67: #{_topo_loss_full.1} parent=5 // pred_region
      %s621 = ssub.s32 %s18, 1
      %s622 = sadd.s32 %s27, %s28
      %p623 = scmp.lt.s32.totalorder %s622, 0
      %s624 = scalar_select %p623, %s622, 0
      %p625 = scmp.lt.s32.totalorder %s624, 0
      %s626 = scalar_select %p625, %s624, 0
      %s627 = smul.addr %s626, 4
      %s628 = scalar_lea.vmem %s0, %s627
      %p629 = pneg %p62
      %p630 = pneg %p59
      %s631 = sadd.s32 %s27, %s28
      %p632 = scmp.lt.s32.totalorder %s631, 0
      %s633 = scalar_select %p632, %s631, 0
      %p634 = scmp.lt.s32.totalorder %s633, 0
      %s635 = scalar_select %p634, %s633, 0
      %s636 = smul.addr %s635, 4
      %s637 = scalar_lea.vmem %s1, %s636
      %p638 = pneg %p94
      %p639 = pneg %p91
      %s640 = sadd.s32 %s27, %s28
      %p641 = scmp.lt.s32.totalorder %s640, 0
      %s642 = scalar_select %p641, %s640, 0
      %p643 = scmp.lt.s32.totalorder %s642, 0
      %s644 = scalar_select %p643, %s642, 0
      %s645 = smul.addr %s644, 4
      %s646 = scalar_lea.vmem %s2, %s645
      %p647 = pneg %p126
      %p648 = pneg %p123
      %s649 = sadd.s32 %s27, %s28
      %p650 = scmp.lt.s32.totalorder %s649, 0
      %s651 = scalar_select %p650, %s649, 0
      %p652 = scmp.lt.s32.totalorder %s651, 0
      %s653 = scalar_select %p652, %s651, 0
      %s654 = smul.addr %s653, 4
      %s655 = scalar_lea.vmem %s3, %s654
      %p656 = pneg %p158
      %p657 = pneg %p155
      %s658 = sadd.s32 %s27, %s28
      %p659 = scmp.lt.s32.totalorder %s658, 0
      %s660 = scalar_select %p659, %s658, 0
      %p661 = scmp.lt.s32.totalorder %s660, 0
      %s662 = scalar_select %p661, %s660, 0
      %s663 = smul.addr %s662, 4
      %s664 = scalar_lea.vmem %s4, %s663
      %p665 = pneg %p190
      %p666 = pneg %p187
      %s667 = sadd.s32 %s27, %s28
      %p668 = scmp.lt.s32.totalorder %s667, 0
      %s669 = scalar_select %p668, %s667, 0
      %p670 = scmp.lt.s32.totalorder %s669, 0
      %s671 = scalar_select %p670, %s669, 0
      %s672 = smul.addr %s671, 4
      %s673 = scalar_lea.vmem %s5, %s672
      %p674 = pneg %p222
      %p675 = pneg %p219
      %s676 = sadd.s32 %s27, %s28
      %p677 = scmp.lt.s32.totalorder %s676, 0
      %s678 = scalar_select %p677, %s676, 0
      %p679 = scmp.lt.s32.totalorder %s678, 0
      %s680 = scalar_select %p679, %s678, 0
      %s681 = smul.addr %s680, 4
      %s682 = scalar_lea.vmem %s6, %s681
      %p683 = pneg %p254
      %p684 = pneg %p251
      %s685 = sadd.s32 %s27, %s28
      %p686 = scmp.lt.s32.totalorder %s685, 0
      %s687 = scalar_select %p686, %s685, 0
      %p688 = scmp.lt.s32.totalorder %s687, 0
      %s689 = scalar_select %p688, %s687, 0
      %s690 = smul.addr %s689, 4
      %s691 = scalar_lea.vmem %s7, %s690
      %p692 = pneg %p286
      %p693 = pneg %p283
      %s694 = sadd.s32 %s27, %s28
      %p695 = scmp.lt.s32.totalorder %s694, 0
      %s696 = scalar_select %p695, %s694, 0
      %p697 = scmp.lt.s32.totalorder %s696, 0
      %s698 = scalar_select %p697, %s696, 0
      %s699 = smul.addr %s698, 4
      %s700 = scalar_lea.vmem %s8, %s699
      %p701 = pneg %p318
      %p702 = pneg %p315
      %s703 = sadd.s32 %s27, %s28
      %p704 = scmp.lt.s32.totalorder %s703, 0
      %s705 = scalar_select %p704, %s703, 0
      %p706 = scmp.lt.s32.totalorder %s705, 0
      %s707 = scalar_select %p706, %s705, 0
      %s708 = smul.addr %s707, 4
      %s709 = scalar_lea.vmem %s9, %s708
      %p710 = pneg %p350
      %p711 = pneg %p347
      %s712 = sadd.s32 %s27, %s28
      %p713 = scmp.lt.s32.totalorder %s712, 0
      %s714 = scalar_select %p713, %s712, 0
      %p715 = scmp.lt.s32.totalorder %s714, 0
      %s716 = scalar_select %p715, %s714, 0
      %s717 = smul.addr %s716, 8
      %s718 = scalar_lea.vmem %s10, %s717
      %p719 = pneg %p382
      %p720 = pneg %p379
      %s721 = sadd.s32 %s27, %s28
      %p722 = scmp.lt.s32.totalorder %s721, 0
      %s723 = scalar_select %p722, %s721, 0
      %p724 = scmp.lt.s32.totalorder %s723, 0
      %s725 = scalar_select %p724, %s723, 0
      %s726 = smul.addr %s725, 8
      %s727 = scalar_lea.vmem %s11, %s726
      %p728 = pneg %p414
      %p729 = pneg %p411
      %p730 = pneg %p440
      %p731 = pneg %p437
      %p732 = scmp.lt.s32.totalorder %s27, 1
      %s733 = scalar_select %p732, %s27, 1
      %s734 = smul.addr %s733, 8
      %s735 = smul.addr %s734, 8
      %s736 = scalar_lea.vmem %s12, %s735
      %s737 = sadd.s32 %s27, %s28
      %p738 = scmp.lt.s32.totalorder %s737, 0
      %s739 = scalar_select %p738, %s737, 0
      %p740 = scmp.lt.s32.totalorder %s739, 0
      %s741 = scalar_select %p740, %s739, 0
      %s742 = smul.addr %s741, 4
      %s743 = scalar_lea.vmem %s0, %s742
      %s744 = sadd.s32 %s27, %s28
      %p745 = scmp.lt.s32.totalorder %s744, 0
      %s746 = scalar_select %p745, %s744, 0
      %s747 = sadd.s32 %s27, %s28
      %p748 = scmp.lt.s32.totalorder %s747, 0
      %s749 = scalar_select %p748, %s747, 0
      %p750 = scmp.lt.s32.totalorder %s749, 0
      %s751 = scalar_select %p750, %s749, 0
      %s752 = smul.addr %s751, 4
      %s753 = scalar_lea.vmem %s1, %s752
      %s754 = sadd.s32 %s27, %s28
      %p755 = scmp.lt.s32.totalorder %s754, 0
      %s756 = scalar_select %p755, %s754, 0
      %s757 = sadd.s32 %s27, %s28
      %p758 = scmp.lt.s32.totalorder %s757, 0
      %s759 = scalar_select %p758, %s757, 0
      %p760 = scmp.lt.s32.totalorder %s759, 0
      %s761 = scalar_select %p760, %s759, 0
      %s762 = smul.addr %s761, 4
      %s763 = scalar_lea.vmem %s2, %s762
      %s764 = sadd.s32 %s27, %s28
      %p765 = scmp.lt.s32.totalorder %s764, 0
      %s766 = scalar_select %p765, %s764, 0
      %s767 = sadd.s32 %s27, %s28
      %p768 = scmp.lt.s32.totalorder %s767, 0
      %s769 = scalar_select %p768, %s767, 0
      %p770 = scmp.lt.s32.totalorder %s769, 0
      %s771 = scalar_select %p770, %s769, 0
      %s772 = smul.addr %s771, 4
      %s773 = scalar_lea.vmem %s3, %s772
      %s774 = sadd.s32 %s27, %s28
      %p775 = scmp.lt.s32.totalorder %s774, 0
      %s776 = scalar_select %p775, %s774, 0
      %s777 = sadd.s32 %s27, %s28
      %p778 = scmp.lt.s32.totalorder %s777, 0
      %s779 = scalar_select %p778, %s777, 0
      %p780 = scmp.lt.s32.totalorder %s779, 0
      %s781 = scalar_select %p780, %s779, 0
      %s782 = smul.addr %s781, 4
      %s783 = scalar_lea.vmem %s4, %s782
      %s784 = sadd.s32 %s27, %s28
      %p785 = scmp.lt.s32.totalorder %s784, 0
      %s786 = scalar_select %p785, %s784, 0
      %s787 = sadd.s32 %s27, %s28
      %p788 = scmp.lt.s32.totalorder %s787, 0
      %s789 = scalar_select %p788, %s787, 0
      %p790 = scmp.lt.s32.totalorder %s789, 0
      %s791 = scalar_select %p790, %s789, 0
      %s792 = smul.addr %s791, 4
      %s793 = scalar_lea.vmem %s5, %s792
      %s794 = sadd.s32 %s27, %s28
      %p795 = scmp.lt.s32.totalorder %s794, 0
      %s796 = scalar_select %p795, %s794, 0
      %s797 = sadd.s32 %s27, %s28
      %p798 = scmp.lt.s32.totalorder %s797, 0
      %s799 = scalar_select %p798, %s797, 0
      %p800 = scmp.lt.s32.totalorder %s799, 0
      %s801 = scalar_select %p800, %s799, 0
      %s802 = smul.addr %s801, 4
      %s803 = scalar_lea.vmem %s6, %s802
      %s804 = sadd.s32 %s27, %s28
      %p805 = scmp.lt.s32.totalorder %s804, 0
      %s806 = scalar_select %p805, %s804, 0
      %s807 = sadd.s32 %s27, %s28
      %p808 = scmp.lt.s32.totalorder %s807, 0
      %s809 = scalar_select %p808, %s807, 0
      %p810 = scmp.lt.s32.totalorder %s809, 0
      %s811 = scalar_select %p810, %s809, 0
      %s812 = smul.addr %s811, 4
      %s813 = scalar_lea.vmem %s7, %s812
      %s814 = sadd.s32 %s27, %s28
      %p815 = scmp.lt.s32.totalorder %s814, 0
      %s816 = scalar_select %p815, %s814, 0
      %s817 = sadd.s32 %s27, %s28
      %p818 = scmp.lt.s32.totalorder %s817, 0
      %s819 = scalar_select %p818, %s817, 0
      %p820 = scmp.lt.s32.totalorder %s819, 0
      %s821 = scalar_select %p820, %s819, 0
      %s822 = smul.addr %s821, 4
      %s823 = scalar_lea.vmem %s8, %s822
      %s824 = sadd.s32 %s27, %s28
      %p825 = scmp.lt.s32.totalorder %s824, 0
      %s826 = scalar_select %p825, %s824, 0
      %s827 = sadd.s32 %s27, %s28
      %p828 = scmp.lt.s32.totalorder %s827, 0
      %s829 = scalar_select %p828, %s827, 0
      %p830 = scmp.lt.s32.totalorder %s829, 0
      %s831 = scalar_select %p830, %s829, 0
      %s832 = smul.addr %s831, 4
      %s833 = scalar_lea.vmem %s9, %s832
      %s834 = sadd.s32 %s27, %s28
      %p835 = scmp.lt.s32.totalorder %s834, 0
      %s836 = scalar_select %p835, %s834, 0
      %s837 = sadd.s32 %s27, %s28
      %p838 = scmp.lt.s32.totalorder %s837, 0
      %s839 = scalar_select %p838, %s837, 0
      %p840 = scmp.lt.s32.totalorder %s839, 0
      %s841 = scalar_select %p840, %s839, 0
      %s842 = smul.addr %s841, 8
      %s843 = scalar_lea.vmem %s10, %s842
      %s844 = sadd.s32 %s27, %s28
      %p845 = scmp.lt.s32.totalorder %s844, 0
      %s846 = scalar_select %p845, %s844, 0
      %s847 = sadd.s32 %s27, %s28
      %p848 = scmp.lt.s32.totalorder %s847, 0
      %s849 = scalar_select %p848, %s847, 0
      %p850 = scmp.lt.s32.totalorder %s849, 0
      %s851 = scalar_select %p850, %s849, 0
      %s852 = smul.addr %s851, 8
      %s853 = scalar_lea.vmem %s11, %s852
      %s854 = sadd.s32 %s27, %s28
      %p855 = scmp.lt.s32.totalorder %s854, 0
      %s856 = scalar_select %p855, %s854, 0
      %p857 = scmp.lt.s32.totalorder %s27, 1
      %s858 = scalar_select %p857, %s27, 1
      %s859 = smul.addr %s858, 8
      %s860 = smul.addr %s859, 8
      %s861 = scalar_lea.vmem %s12, %s860
      %s862 = sadd.s32 %s27, %s28
      %p863 = scmp.eq.s32.totalorder %s28, 0
      // Predicated region
      $region69: #{_topo_loss_full.1} parent=67 // pred_check
        %p864 = pneg %p863
      $region70: #{_topo_loss_full.1} parent=67 // pred_check_branch
        %866 = sbr.rel (%p864) target = $region72
      $region71: #{_topo_loss_full.1} parent=67 // pred_region
        %867 = vst [vmem:[%s861] sm:$0xff] 0.0
        %868 = vst [vmem:[%s861 + $0x8] sm:$0xff] 0.0
        %869 = vst [vmem:[%s861 + $0x10] sm:$0xff] 0.0
        %870 = vst [vmem:[%s861 + $0x18] sm:$0xff] 0.0
        %871 = vst [vmem:[%s861 + $0x20] sm:$0xff] 0.0
        %872 = vst [vmem:[%s861 + $0x28] sm:$0xff] 0.0
        %873 = vst [vmem:[%s861 + $0x30] sm:$0xff] 0.0
        %874 = vst [vmem:[%s861 + $0x38] sm:$0xff] 0.0
      $region72: #{_topo_loss_full.1} parent=67 // pred_fallthru
        _
      %s875 = smul.u32 %s862, 4
      %s876 = ssub.s32 4, %s875
      %v877 = vlaneseq
      %v878 = vshrl.u32 %v877, 7
      %v879 = vstv %s876
      %vm880 = vcmp.lt.s32.totalorder %v878, %v879
      %v881 = vld [vmem:[%s743] sm:$0xf]
      %v882 = vxor.u32 %v881, 2147483648
      %v883 = vmul.f32 %v882, 1.442695
      %v884 = vpow.pop %v883
      %v885 = vadd.f32 %v884, 1.0
      %v886 = vrcp.pop %v885
      %v887 = vmul.f32 %v885, %v886
      %v888 = vsub.f32 1.0, %v887
      %v889 = vmul.f32 %v886, %v888
      %v890 = vadd.f32 %v886, %v889
      %vm891 = vweird.f32 %v885
      %vm892 = vweird.f32 %v886
      %vm893 = vmor %vm891, %vm892
      %v894 = vsel %vm893, %v886, %v890
      %v895 = vand.u32 2147483647, %v885
      %vm896 = vcmp.eq.f32.partialorder %v895, 8.507059e+37
      %v897 = vand.u32 %v885, 2147483648
      %v898 = vor.u32 1.1754944e-38, %v897
      %v899 = vsel %vm896, %v898, %v894
      %v900 = vmul.f32 1.0, %v899
      %v901 = vsel %vm880, %v900, 0.0
      %v902 = vld [vmem:[%s753] sm:$0xf]
      %v903 = vsel %vm880, %v902, 0.0
      %v904 = vmul.f32 %v901, %v903
      %v905 = vld [vmem:[%s861] sm:$0x1]
      %vm906 = vcmask 1043456
      %v907 = vsel %vm906, %v904, 0.0
      %v908 = vrot.slane %v907, 4
      %v909 = vadd.f32 %v907, %v908
      %v910 = vrot.slane %v909, 2
      %v911 = vadd.f32 %v909, %v910
      %v912 = vrot.slane %v911, 1
      %v913 = vadd.f32 %v911, %v912
      %v914 = vadd.f32 %v905, %v913
      %915 = vst [vmem:[%s861] sm:$0x1] %v914
      %v916 = vld [vmem:[%s861 + $0x8] sm:$0x1]
      %v917 = vsel %vm906, %v901, 0.0
      %v918 = vrot.slane %v917, 4
      %v919 = vadd.f32 %v917, %v918
      %v920 = vrot.slane %v919, 2
      %v921 = vadd.f32 %v919, %v920
      %v922 = vrot.slane %v921, 1
      %v923 = vadd.f32 %v921, %v922
      %v924 = vadd.f32 %v916, %v923
      %925 = vst [vmem:[%s861 + $0x8] sm:$0x1] %v924
      %v926 = vld [vmem:[%s861 + $0x10] sm:$0x1]
      %v927 = vsel %vm906, %v903, 0.0
      %v928 = vrot.slane %v927, 4
      %v929 = vadd.f32 %v927, %v928
      %v930 = vrot.slane %v929, 2
      %v931 = vadd.f32 %v929, %v930
      %v932 = vrot.slane %v931, 1
      %v933 = vadd.f32 %v931, %v932
      %v934 = vadd.f32 %v926, %v933
      %935 = vst [vmem:[%s861 + $0x10] sm:$0x1] %v934
      %v936 = vld [vmem:[%s763] sm:$0xf]
      %v937 = vld [vmem:[%s773] sm:$0xf]
      %v938 = vmax.f32 %v936, 0.0
      %v939 = vmul.f32 %v936, %v937
      %v940 = vsub.f32 %v938, %v939
      %v941 = vand.u32 2147483647, %v936
      %v942 = vsub.f32 0.0, %v941
      %v943 = vmul.f32 %v942, 1.442695
      %v944 = vpow.pop %v943
      %v945 = vadd.f32 %v944, 1.0
      %v946 = vlog2.pop %v945
      %v947 = vmul.f32 %v946, 0.6931472
      %v948 = vmul.f32 -0.5, %v944
      %v949 = vadd.f32 %v948, 1.0
      %v950 = vmul.f32 %v949, %v944
      %v951 = vand.u32 2147483647, %v944
      %vm952 = vcmp.lt.f32.partialorder %v951, 0.0004427343
      %v953 = vsel %vm952, %v950, %v947
      %v954 = vadd.f32 %v940, %v953
      %v955 = vsel %vm880, %v954, 0.0
      %v956 = vld [vmem:[%s861 + $0x18] sm:$0x1]
      %v957 = vsel %vm906, %v955, 0.0
      %v958 = vrot.slane %v957, 4
      %v959 = vadd.f32 %v957, %v958
      %v960 = vrot.slane %v959, 2
      %v961 = vadd.f32 %v959, %v960
      %v962 = vrot.slane %v961, 1
      %v963 = vadd.f32 %v961, %v962
      %v964 = vadd.f32 %v956, %v963
      %965 = vst [vmem:[%s861 + $0x18] sm:$0x1] %v964
      %v966 = vld [vmem:[%s783] sm:$0xf]
      %v967 = vld [vmem:[%s793] sm:$0xf]
      %v968 = vmax.f32 %v966, 0.0
      %v969 = vmul.f32 %v966, %v967
      %v970 = vsub.f32 %v968, %v969
      %v971 = vand.u32 2147483647, %v966
      %v972 = vsub.f32 0.0, %v971
      %v973 = vmul.f32 %v972, 1.442695
      %v974 = vpow.pop %v973
      %v975 = vadd.f32 %v974, 1.0
      %v976 = vlog2.pop %v975
      %v977 = vmul.f32 %v976, 0.6931472
      %v978 = vmul.f32 -0.5, %v974
      %v979 = vadd.f32 %v978, 1.0
      %v980 = vmul.f32 %v979, %v974
      %v981 = vand.u32 2147483647, %v974
      %vm982 = vcmp.lt.f32.partialorder %v981, 0.0004427343
      %v983 = vsel %vm982, %v980, %v977
      %v984 = vadd.f32 %v970, %v983
      %v985 = vsel %vm880, %v984, 0.0
      %v986 = vld [vmem:[%s861 + $0x20] sm:$0x1]
      %v987 = vsel %vm906, %v985, 0.0
      %v988 = vrot.slane %v987, 4
      %v989 = vadd.f32 %v987, %v988
      %v990 = vrot.slane %v989, 2
      %v991 = vadd.f32 %v989, %v990
      %v992 = vrot.slane %v991, 1
      %v993 = vadd.f32 %v991, %v992
      %v994 = vadd.f32 %v986, %v993
      %995 = vst [vmem:[%s861 + $0x20] sm:$0x1] %v994
      %v996 = vld [vmem:[%s803] sm:$0xf]
      %v997 = vld [vmem:[%s813] sm:$0xf]
      %v998 = vmax.f32 %v996, 0.0
      %v999 = vmul.f32 %v996, %v997
      %v1000 = vsub.f32 %v998, %v999
      %v1001 = vand.u32 2147483647, %v996
      %v1002 = vsub.f32 0.0, %v1001
      %v1003 = vmul.f32 %v1002, 1.442695
      %v1004 = vpow.pop %v1003
      %v1005 = vadd.f32 %v1004, 1.0
      %v1006 = vlog2.pop %v1005
      %v1007 = vmul.f32 %v1006, 0.6931472
      %v1008 = vmul.f32 -0.5, %v1004
      %v1009 = vadd.f32 %v1008, 1.0
      %v1010 = vmul.f32 %v1009, %v1004
      %v1011 = vand.u32 2147483647, %v1004
      %vm1012 = vcmp.lt.f32.partialorder %v1011, 0.0004427343
      %v1013 = vsel %vm1012, %v1010, %v1007
      %v1014 = vadd.f32 %v1000, %v1013
      %v1015 = vsel %vm880, %v1014, 0.0
      %v1016 = vld [vmem:[%s861 + $0x28] sm:$0x1]
      %v1017 = vsel %vm906, %v1015, 0.0
      %v1018 = vrot.slane %v1017, 4
      %v1019 = vadd.f32 %v1017, %v1018
      %v1020 = vrot.slane %v1019, 2
      %v1021 = vadd.f32 %v1019, %v1020
      %v1022 = vrot.slane %v1021, 1
      %v1023 = vadd.f32 %v1021, %v1022
      %v1024 = vadd.f32 %v1016, %v1023
      %1025 = vst [vmem:[%s861 + $0x28] sm:$0x1] %v1024
      %v1026 = vld [vmem:[%s823] sm:$0xf]
      %v1027 = vld [vmem:[%s833] sm:$0xf]
      %v1028 = vmax.f32 %v1026, 0.0
      %v1029 = vmul.f32 %v1026, %v1027
      %v1030 = vsub.f32 %v1028, %v1029
      %v1031 = vand.u32 2147483647, %v1026
      %v1032 = vsub.f32 0.0, %v1031
      %v1033 = vmul.f32 %v1032, 1.442695
      %v1034 = vpow.pop %v1033
      %v1035 = vadd.f32 %v1034, 1.0
      %v1036 = vlog2.pop %v1035
      %v1037 = vmul.f32 %v1036, 0.6931472
      %v1038 = vmul.f32 -0.5, %v1034
      %v1039 = vadd.f32 %v1038, 1.0
      %v1040 = vmul.f32 %v1039, %v1034
      %v1041 = vand.u32 2147483647, %v1034
      %vm1042 = vcmp.lt.f32.partialorder %v1041, 0.0004427343
      %v1043 = vsel %vm1042, %v1040, %v1037
      %v1044 = vadd.f32 %v1030, %v1043
      %v1045 = vsel %vm880, %v1044, 0.0
      %v1046 = vld [vmem:[%s861 + $0x30] sm:$0x1]
      %v1047 = vsel %vm906, %v1045, 0.0
      %v1048 = vrot.slane %v1047, 4
      %v1049 = vadd.f32 %v1047, %v1048
      %v1050 = vrot.slane %v1049, 2
      %v1051 = vadd.f32 %v1049, %v1050
      %v1052 = vrot.slane %v1051, 1
      %v1053 = vadd.f32 %v1051, %v1052
      %v1054 = vadd.f32 %v1046, %v1053
      %1055 = vst [vmem:[%s861 + $0x30] sm:$0x1] %v1054
      %s1056 = smul.u32 %s862, 8
      %s1057 = ssub.s32 8, %s1056
      %v1058 = vstv %s1057
      %vm1059 = vcmp.lt.s32.totalorder %v878, %v1058
      %v1060 = vld [vmem:[%s843] sm:$0xff]
      %v1061 = vld [vmem:[%s853] sm:$0xff]
      %v1062 = vsub.f32 %v1060, %v1061
      %v1063 = vmul.f32 %v1062, %v1062
      %v1064 = vsel %vm1059, %v1063, 0.0
      %v1065 = vadd.f32 %v1064, 0.0
      %v1066 = vld [vmem:[%s861 + $0x38] sm:$0xff]
      %v1067 = vadd.f32 %v1066, %v1065
      %1068 = vst [vmem:[%s861 + $0x38] sm:$0xff] %v1067
      %p1069 = scmp.lt.s32.totalorder %s27, 1
      %s1070 = scalar_select %p1069, %s27, 1
      %s1071 = smul.addr %s1070, 8
      %s1072 = smul.addr %s1071, 8
      %s1073 = scalar_lea.vmem %s12, %s1072
      // Predicated region
      $region73: #{_topo_loss_full.1} parent=67 // pred_check
        %p1074 = pneg %p437
      $region74: #{_topo_loss_full.1} parent=67 // pred_check_branch
        %1076 = sbr.rel (%p1074) target = $region76
      $region75: #{_topo_loss_full.1} parent=67 // pred_region
        _
      $region76: #{_topo_loss_full.1} parent=67 // pred_fallthru
        _
    $region68: #{_topo_loss_full.1} parent=5 // pred_fallthru
      _
    %p1077 = scmp.le.s32.totalorder 2, %s18
    // Predicated region
    $region77: #{_topo_loss_full.1} parent=5 // pred_check
      %p1078 = pneg %p1077
    $region78: #{_topo_loss_full.1} parent=5 // pred_check_branch
      %1080 = sbr.rel (%p1078) target = $region80
    $region79: #{_topo_loss_full.1} parent=5 // pred_region
      %s1081 = ssub.s32 %s18, 2
      // Predicated region
      $region81: #{_topo_loss_full.1} parent=79 // pred_check
        %p1082 = pneg %p443
      $region82: #{_topo_loss_full.1} parent=79 // pred_check_branch
        %1084 = sbr.rel (%p1082) target = $region84
      $region83: #{_topo_loss_full.1} parent=79 // pred_region
        %p1085 = scmp.lt.s32.totalorder %s29, 1
        %s1086 = scalar_select %p1085, %s29, 1
        %s1087 = smul.addr %s1086, 8
        %s1088 = smul.addr %s1087, 8
        %s1089 = scalar_lea.vmem %s12, %s1088
      $region84: #{_topo_loss_full.1} parent=79 // pred_fallthru
        _
    $region80: #{_topo_loss_full.1} parent=5 // pred_fallthru
      _
  $region6: #{_topo_loss_full.1} parent=0 // loop_footer
    %s22 = sadd.s32 1, %s18
  $region7: #{_topo_loss_full.1} parent=0 // loop_footer_branch
    %17 = sbr.rel target = $region3
  $region8: #{_topo_loss_full.1} parent=0 // loop_exit
    _

</llo_original>
